<compile_context>
chip_gen: v7x
topology: tpu7x:2x2x1
jax: 0.10.0
libtpu: 0.0.40
codegen_flags: <defaults>
</compile_context>

<pallas_src>
import functools

import jax
import jax.numpy as jnp
import numpy as np
from jax.experimental import pallas as pl
from jax.experimental.pallas import tpu as pltpu

_LANE = 128
_SUBLANE = 8


def _round_up(x, m):
    return (x + m - 1) // m * m


def _mlp_kernel(n_layers, x_ref, *refs):
    """Fused MLP for one row tile.

    x_ref : [rt, Hp]  bf16 row tile of the (padded) input
    refs  : w0, b0, w1, b1, ..., w_{L-1}, b_{L-1}, o_ref
            weights are bf16 [in, out]; biases are f32 [1, out]
    o_ref : [rt, Op]  f32
    """
    o_ref = refs[-1]
    h = x_ref[...]                                     # bf16
    for i in range(n_layers):                          # unrolled at trace time (L static)
        w = refs[2 * i][...]                           # bf16 -> MXU
        b = refs[2 * i + 1][...]                       # f32
        acc = jnp.dot(h, w, preferred_element_type=jnp.float32) + b
        if i < n_layers - 1:                           # ReLU after every layer but the last
            h = jnp.maximum(acc, 0.0).astype(jnp.bfloat16)
        else:
            o_ref[...] = acc.astype(o_ref.dtype)


def _choose_row_tiling(batch, row_tile):
    """Row tile: multiple of 8, minimal batch padding, >=2 grid steps when possible."""
    b8 = _round_up(batch, _SUBLANE)
    max_tiles = b8 // _SUBLANE
    row_tile = max(_SUBLANE, _round_up(row_tile, _SUBLANE))
    n_tiles = pl.cdiv(b8, row_tile)
    # v7x megacore: want at least 2 row tiles so "parallel" can shard across 2 TCs.
    n_tiles = min(max(n_tiles, min(2, max_tiles)), max_tiles)
    rt = _round_up(pl.cdiv(b8, n_tiles), _SUBLANE)
    n_tiles = pl.cdiv(b8, rt)
    return rt, rt * n_tiles, n_tiles


def bag_model_after_nn(x, weights, biases, *, row_tile=512):
    """x: [B, hid_dim] f32 -> [B, out_dim] f32, matching BagModelAfterNN.forward."""
    assert len(weights) == len(biases) and len(weights) >= 1
    B, hid = x.shape
    out_dim = weights[-1].shape[1]
    n_layers = len(weights)

    # Lane-dense feature padding (zeros are numerically inert through Linear+ReLU).
    hp = _round_up(hid, _LANE)
    op = _round_up(out_dim, _LANE)

    # Pad + cast parameters.
    wp, bp = [], []
    for i, (w, b) in enumerate(zip(weights, biases)):
        n_out = hp if i < n_layers - 1 else op
        wp.append(jnp.pad(w, ((0, hp - w.shape[0]), (0, n_out - w.shape[1])))
                  .astype(jnp.bfloat16))
        bp.append(jnp.pad(b, ((0, 0), (0, n_out - b.shape[1]))).astype(jnp.float32))

    wbytes = sum(int(np.prod(w.shape)) * 2 for w in wp)
    bbytes = sum(int(np.prod(b.shape)) * 4 for b in bp)

    # If the resident weight set gets big, shrink the row tile (v7x has only 64 MiB VMEM).
    if 2 * (wbytes + bbytes) > (24 << 20):
        row_tile = min(row_tile, 256)
    # TODO(synk): when (L-1)*Hp^2 bf16 weights exceed ~24 MiB, switch to K/N tiling over
    # an 'arbitrary' inner grid axis with a VMEM f32 accumulator instead of keeping all
    # L weight matrices VMEM-resident (needed for very large hid_dim on v7x).

    rt, Bp, n_tiles = _choose_row_tiling(B, row_tile)

    # Padded batch rows are independent (row-wise MLP) and sliced off afterwards.
    xp = jnp.pad(x, ((0, Bp - B), (0, hp - hid))).astype(jnp.bfloat16)

    # Explicit VMEM budget: streamed x/out tiles (double-buffered), resident params
    # (conservatively counted double-buffered), plus activation scratch.
    stream_bytes = 2 * rt * hp * 2 + 2 * rt * op * 4
    scratch_bytes = 4 * rt * hp * 4
    need = 2 * (wbytes + bbytes) + stream_bytes + scratch_bytes
    try:
        phys_vmem = int(pltpu.get_tpu_info().vmem_capacity_bytes)
    except Exception:
        phys_vmem = 64 << 20                          # v7x per-TensorCore floor
    vmem_limit = min(phys_vmem, max(32 << 20, int(1.5 * need) + (2 << 20)))

    flops = 2 * Bp * sum(int(w.shape[0]) * int(w.shape[1]) for w in wp)
    bytes_accessed = int(xp.size) * 2 + Bp * op * 4 + wbytes + bbytes
    cost = pl.CostEstimate(flops=flops, transcendentals=0, bytes_accessed=bytes_accessed)
    compiler_params = pltpu.CompilerParams(
        dimension_semantics=("parallel",),            # megacore sharding on v7x
        vmem_limit_bytes=vmem_limit)

    inputs = [xp]
    for w, b in zip(wp, bp):
        inputs += [w, b]

    def build(single_buffer_consts):
        const_kwargs = dict(pipeline_mode=pl.Buffered(1)) if single_buffer_consts else {}
        in_specs = [pl.BlockSpec((rt, hp), lambda i: (i, 0))]
        for w, b in zip(wp, bp):
            # Constant index_maps: params stay VMEM-resident across grid steps.
            in_specs.append(pl.BlockSpec(w.shape, lambda i: (0, 0), **const_kwargs))
            in_specs.append(pl.BlockSpec(b.shape, lambda i: (0, 0), **const_kwargs))
        return pl.pallas_call(
            functools.partial(_mlp_kernel, n_layers),
            out_shape=jax.ShapeDtypeStruct((Bp, op), jnp.float32),
            grid=(n_tiles,),
            in_specs=in_specs,
            out_specs=pl.BlockSpec((rt, op), lambda i: (i, 0)),
            compiler_params=compiler_params,
            cost_estimate=cost,
        )

    try:
        # Preferred path: single-buffer the grid-invariant params (halves their VMEM).
        out = jax.block_until_ready(build(True)(*inputs))
    except Exception:
        # pipeline_mode=pl.Buffered(1) unsupported in this build -> default buffering.
        out = build(False)(*inputs)

    return out[:B, :out_dim]


def init_params(key, hid_dim, out_dim, after_n_layers):
    """Deterministic synthetic parameters mirroring the nn.Sequential construction."""
    if after_n_layers == 1:
        dims = [(hid_dim, out_dim)]
    else:
        dims = [(hid_dim, hid_dim)] * (after_n_layers - 1) + [(hid_dim, out_dim)]
    keys = jax.random.split(key, 2 * len(dims))
    weights, biases = [], []
    for i, (fi, fo) in enumerate(dims):
        a = float(np.sqrt(6.0 / (fi + fo)))
        weights.append(jax.random.uniform(keys[2 * i], (fi, fo), jnp.float32, -a, a))
        biases.append(jax.random.uniform(keys[2 * i + 1], (1, fo), jnp.float32, -a, a))
    return weights, biases


def bag_model_after_nn_ref(x, weights, biases, operand_dtype=jnp.float32):
    """Pure-JAX reference; operand_dtype=bf16 mirrors the kernel's MXU input precision."""
    h = x
    n = len(weights)
    for i, (w, b) in enumerate(zip(weights, biases)):
        h = jnp.dot(h.astype(operand_dtype), w.astype(operand_dtype),
                    preferred_element_type=jnp.float32) + b
        if i < n - 1:
            h = jax.nn.relu(h)
    return h


if __name__ == "__main__":
    B, HID_DIM, OUT_DIM, AFTER_N_LAYERS = 16, 32, 8, 3
    key = jax.random.PRNGKey(0)
    kx, kp, kp1 = jax.random.split(key, 3)

    x = jax.random.normal(kx, (B, HID_DIM), jnp.float32)

    # Multi-layer path (after_n_layers >= 2).
    weights, biases = init_params(kp, HID_DIM, OUT_DIM, AFTER_N_LAYERS)
    out = jax.block_until_ready(bag_model_after_nn(x, weights, biases))
    assert out.shape == (B, OUT_DIM)
    # Primary check: reference with the same bf16-operand / f32-accumulate precision.
    ref_bf16 = bag_model_after_nn_ref(x, weights, biases, operand_dtype=jnp.bfloat16)
    np.testing.assert_allclose(np.asarray(out), np.asarray(ref_bf16), rtol=5e-3, atol=5e-3)
    # Sanity check vs. pure-f32 module semantics (bf16 operands -> loose tolerance).
    ref_f32 = bag_model_after_nn_ref(x, weights, biases)
    np.testing.assert_allclose(np.asarray(out), np.asarray(ref_f32), rtol=1e-1, atol=1e-1)

    # Ragged batch (exercises row-tile rebalancing + padded-row slicing).
    xr = x[:13]
    out_r = jax.block_until_ready(bag_model_after_nn(xr, weights, biases))
    ref_r = bag_model_after_nn_ref(xr, weights, biases, operand_dtype=jnp.bfloat16)
    np.testing.assert_allclose(np.asarray(out_r), np.asarray(ref_r), rtol=5e-3, atol=5e-3)

    # Single-layer path (after_n_layers == 1).
    w1, b1 = init_params(kp1, HID_DIM, OUT_DIM, 1)
    out1 = jax.block_until_ready(bag_model_after_nn(x, w1, b1))
    ref1 = bag_model_after_nn_ref(x, w1, b1, operand_dtype=jnp.bfloat16)
    np.testing.assert_allclose(np.asarray(out1), np.asarray(ref1), rtol=5e-3, atol=5e-3)

    print("KERNEL_OK")
</pallas_src>

<mosaic_0001>
module attributes {stable_mosaic.version = 11 : i64} {
  func.func @_mlp_kernel(%arg0: i32, %arg1: memref<8x128xbf16, #tpu.memory_space<vmem>>, %arg2: memref<128x128xbf16, #tpu.memory_space<vmem>>, %arg3: memref<1x128xf32, #tpu.memory_space<vmem>>, %arg4: memref<128x128xbf16, #tpu.memory_space<vmem>>, %arg5: memref<1x128xf32, #tpu.memory_space<vmem>>, %arg6: memref<128x128xbf16, #tpu.memory_space<vmem>>, %arg7: memref<1x128xf32, #tpu.memory_space<vmem>>, %arg8: memref<8x128xf32, #tpu.memory_space<vmem>>) attributes {dimension_semantics = [#tpu.dimension_semantics<parallel>], iteration_bounds = array<i64: 2>, scalar_prefetch = 0 : i64, scratch_operands = 0 : i64, tpu.core_type = #tpu.core_type<tc>, window_params = [{transform_indices = @transform_0, window_bounds = array<i64: 8, 128>}, {pipeline_mode = #tpu.pipeline_mode<synchronous>, transform_indices = @transform_1, window_bounds = array<i64: 128, 128>}, {pipeline_mode = #tpu.pipeline_mode<synchronous>, transform_indices = @transform_2, window_bounds = array<i64: 1, 128>}, {pipeline_mode = #tpu.pipeline_mode<synchronous>, transform_indices = @transform_3, window_bounds = array<i64: 128, 128>}, {pipeline_mode = #tpu.pipeline_mode<synchronous>, transform_indices = @transform_4, window_bounds = array<i64: 1, 128>}, {pipeline_mode = #tpu.pipeline_mode<synchronous>, transform_indices = @transform_5, window_bounds = array<i64: 128, 128>}, {pipeline_mode = #tpu.pipeline_mode<synchronous>, transform_indices = @transform_6, window_bounds = array<i64: 1, 128>}, {transform_indices = @transform_7, window_bounds = array<i64: 8, 128>}]} {
    %c0 = arith.constant 0 : index
    %c0_0 = arith.constant 0 : index
    %0 = vector.load %arg1[%c0, %c0_0] : memref<8x128xbf16, #tpu.memory_space<vmem>>, vector<8x128xbf16>
    %c0_1 = arith.constant 0 : index
    %c0_2 = arith.constant 0 : index
    %1 = vector.load %arg2[%c0_1, %c0_2] : memref<128x128xbf16, #tpu.memory_space<vmem>>, vector<128x128xbf16>
    %c0_3 = arith.constant 0 : index
    %c0_4 = arith.constant 0 : index
    %2 = vector.load %arg3[%c0_3, %c0_4] : memref<1x128xf32, #tpu.memory_space<vmem>>, vector<1x128xf32>
    %cst = arith.constant dense<0.000000e+00> : vector<8x128xf32>
    %3 = tpu.matmul %0, %1, %cst {dimension_numbers = #tpu.dot_dimension_numbers<[1], [0], [0], [1], [0, 0, 1, 1], [], []>} : vector<8x128xbf16>, vector<128x128xbf16>, vector<8x128xf32> -> vector<8x128xf32>
    %4 = vector.broadcast %2 : vector<1x128xf32> to vector<8x128xf32>
    %5 = arith.addf %3, %4 : vector<8x128xf32>
    %cst_5 = arith.constant 0.000000e+00 : f32
    %6 = vector.broadcast %cst_5 : f32 to vector<8x128xf32>
    %7 = arith.maximumf %5, %6 : vector<8x128xf32>
    %8 = arith.truncf %7 : vector<8x128xf32> to vector<8x128xbf16>
    %c0_6 = arith.constant 0 : index
    %c0_7 = arith.constant 0 : index
    %9 = vector.load %arg4[%c0_6, %c0_7] : memref<128x128xbf16, #tpu.memory_space<vmem>>, vector<128x128xbf16>
    %c0_8 = arith.constant 0 : index
    %c0_9 = arith.constant 0 : index
    %10 = vector.load %arg5[%c0_8, %c0_9] : memref<1x128xf32, #tpu.memory_space<vmem>>, vector<1x128xf32>
    %cst_10 = arith.constant dense<0.000000e+00> : vector<8x128xf32>
    %11 = tpu.matmul %8, %9, %cst_10 {dimension_numbers = #tpu.dot_dimension_numbers<[1], [0], [0], [1], [0, 0, 1, 1], [], []>} : vector<8x128xbf16>, vector<128x128xbf16>, vector<8x128xf32> -> vector<8x128xf32>
    %12 = vector.broadcast %10 : vector<1x128xf32> to vector<8x128xf32>
    %13 = arith.addf %11, %12 : vector<8x128xf32>
    %cst_11 = arith.constant 0.000000e+00 : f32
    %14 = vector.broadcast %cst_11 : f32 to vector<8x128xf32>
    %15 = arith.maximumf %13, %14 : vector<8x128xf32>
    %16 = arith.truncf %15 : vector<8x128xf32> to vector<8x128xbf16>
    %c0_12 = arith.constant 0 : index
    %c0_13 = arith.constant 0 : index
    %17 = vector.load %arg6[%c0_12, %c0_13] : memref<128x128xbf16, #tpu.memory_space<vmem>>, vector<128x128xbf16>
    %c0_14 = arith.constant 0 : index
    %c0_15 = arith.constant 0 : index
    %18 = vector.load %arg7[%c0_14, %c0_15] : memref<1x128xf32, #tpu.memory_space<vmem>>, vector<1x128xf32>
    %cst_16 = arith.constant dense<0.000000e+00> : vector<8x128xf32>
    %19 = tpu.matmul %16, %17, %cst_16 {dimension_numbers = #tpu.dot_dimension_numbers<[1], [0], [0], [1], [0, 0, 1, 1], [], []>} : vector<8x128xbf16>, vector<128x128xbf16>, vector<8x128xf32> -> vector<8x128xf32>
    %20 = vector.broadcast %18 : vector<1x128xf32> to vector<8x128xf32>
    %21 = arith.addf %19, %20 : vector<8x128xf32>
    %c0_17 = arith.constant 0 : index
    %c0_18 = arith.constant 0 : index
    %22 = vector.load %arg8[%c0_17, %c0_18] : memref<8x128xf32, #tpu.memory_space<vmem>>, vector<8x128xf32>
    tpu.vector_store %arg8[%c0_17, %c0_18], %21 {strides = array<i32>} : memref<8x128xf32, #tpu.memory_space<vmem>>, vector<8x128xf32>,
    return
  }
  func.func @transform_0(%arg0: i32) -> (i32, i32) {
    %c0_i32 = arith.constant 0 : i32
    %c0_i32_0 = arith.constant 0 : i32
    return %arg0, %c0_i32 : i32, i32
  }
  func.func @transform_1(%arg0: i32) -> (i32, i32) {
    %c0_i32 = arith.constant 0 : i32
    %c0_i32_0 = arith.constant 0 : i32
    %c0_i32_1 = arith.constant 0 : i32
    return %c0_i32, %c0_i32_0 : i32, i32
  }
  func.func @transform_2(%arg0: i32) -> (i32, i32) {
    %c0_i32 = arith.constant 0 : i32
    %c0_i32_0 = arith.constant 0 : i32
    %c0_i32_1 = arith.constant 0 : i32
    return %c0_i32, %c0_i32_0 : i32, i32
  }
  func.func @transform_3(%arg0: i32) -> (i32, i32) {
    %c0_i32 = arith.constant 0 : i32
    %c0_i32_0 = arith.constant 0 : i32
    %c0_i32_1 = arith.constant 0 : i32
    return %c0_i32, %c0_i32_0 : i32, i32
  }
  func.func @transform_4(%arg0: i32) -> (i32, i32) {
    %c0_i32 = arith.constant 0 : i32
    %c0_i32_0 = arith.constant 0 : i32
    %c0_i32_1 = arith.constant 0 : i32
    return %c0_i32, %c0_i32_0 : i32, i32
  }
  func.func @transform_5(%arg0: i32) -> (i32, i32) {
    %c0_i32 = arith.constant 0 : i32
    %c0_i32_0 = arith.constant 0 : i32
    %c0_i32_1 = arith.constant 0 : i32
    return %c0_i32, %c0_i32_0 : i32, i32
  }
  func.func @transform_6(%arg0: i32) -> (i32, i32) {
    %c0_i32 = arith.constant 0 : i32
    %c0_i32_0 = arith.constant 0 : i32
    %c0_i32_1 = arith.constant 0 : i32
    return %c0_i32, %c0_i32_0 : i32, i32
  }
  func.func @transform_7(%arg0: i32) -> (i32, i32) {
    %c0_i32 = arith.constant 0 : i32
    %c0_i32_0 = arith.constant 0 : i32
    return %arg0, %c0_i32 : i32, i32
  }
}

module attributes {stable_mosaic.version = 11 : i64} {
  func.func @_mlp_kernel(%arg0: i32, %arg1: memref<8x128xbf16, #tpu.memory_space<vmem>>, %arg2: memref<128x128xbf16, #tpu.memory_space<vmem>>, %arg3: memref<1x128xf32, #tpu.memory_space<vmem>>, %arg4: memref<128x128xbf16, #tpu.memory_space<vmem>>, %arg5: memref<1x128xf32, #tpu.memory_space<vmem>>, %arg6: memref<128x128xbf16, #tpu.memory_space<vmem>>, %arg7: memref<1x128xf32, #tpu.memory_space<vmem>>, %arg8: memref<8x128xf32, #tpu.memory_space<vmem>>) attributes {dimension_semantics = [#tpu.dimension_semantics<parallel>], iteration_bounds = array<i64: 2>, scalar_prefetch = 0 : i64, scratch_operands = 0 : i64, tpu.core_type = #tpu.core_type<tc>, window_params = [{transform_indices = @transform_0, window_bounds = array<i64: 8, 128>}, {pipeline_mode = #tpu.pipeline_mode<synchronous>, transform_indices = @transform_1, window_bounds = array<i64: 128, 128>}, {pipeline_mode = #tpu.pipeline_mode<synchronous>, transform_indices = @transform_2, window_bounds = array<i64: 1, 128>}, {pipeline_mode = #tpu.pipeline_mode<synchronous>, transform_indices = @transform_3, window_bounds = array<i64: 128, 128>}, {pipeline_mode = #tpu.pipeline_mode<synchronous>, transform_indices = @transform_4, window_bounds = array<i64: 1, 128>}, {pipeline_mode = #tpu.pipeline_mode<synchronous>, transform_indices = @transform_5, window_bounds = array<i64: 128, 128>}, {pipeline_mode = #tpu.pipeline_mode<synchronous>, transform_indices = @transform_6, window_bounds = array<i64: 1, 128>}, {transform_indices = @transform_7, window_bounds = array<i64: 8, 128>}]} {
    %c0 = arith.constant 0 : index
    %c0_0 = arith.constant 0 : index
    %0 = vector.load %arg1[%c0, %c0_0] : memref<8x128xbf16, #tpu.memory_space<vmem>>, vector<8x128xbf16>
    %c0_1 = arith.constant 0 : index
    %c0_2 = arith.constant 0 : index
    %1 = vector.load %arg2[%c0_1, %c0_2] : memref<128x128xbf16, #tpu.memory_space<vmem>>, vector<128x128xbf16>
    %c0_3 = arith.constant 0 : index
    %c0_4 = arith.constant 0 : index
    %2 = vector.load %arg3[%c0_3, %c0_4] : memref<1x128xf32, #tpu.memory_space<vmem>>, vector<1x128xf32>
    %cst = arith.constant dense<0.000000e+00> : vector<8x128xf32>
    %3 = tpu.matmul %0, %1, %cst {dimension_numbers = #tpu.dot_dimension_numbers<[1], [0], [0], [1], [0, 0, 1, 1], [], []>} : vector<8x128xbf16>, vector<128x128xbf16>, vector<8x128xf32> -> vector<8x128xf32>
    %4 = vector.broadcast %2 : vector<1x128xf32> to vector<8x128xf32>
    %5 = arith.addf %3, %4 : vector<8x128xf32>
    %cst_5 = arith.constant 0.000000e+00 : f32
    %6 = vector.broadcast %cst_5 : f32 to vector<8x128xf32>
    %7 = arith.maximumf %5, %6 : vector<8x128xf32>
    %8 = arith.truncf %7 : vector<8x128xf32> to vector<8x128xbf16>
    %c0_6 = arith.constant 0 : index
    %c0_7 = arith.constant 0 : index
    %9 = vector.load %arg4[%c0_6, %c0_7] : memref<128x128xbf16, #tpu.memory_space<vmem>>, vector<128x128xbf16>
    %c0_8 = arith.constant 0 : index
    %c0_9 = arith.constant 0 : index
    %10 = vector.load %arg5[%c0_8, %c0_9] : memref<1x128xf32, #tpu.memory_space<vmem>>, vector<1x128xf32>
    %cst_10 = arith.constant dense<0.000000e+00> : vector<8x128xf32>
    %11 = tpu.matmul %8, %9, %cst_10 {dimension_numbers = #tpu.dot_dimension_numbers<[1], [0], [0], [1], [0, 0, 1, 1], [], []>} : vector<8x128xbf16>, vector<128x128xbf16>, vector<8x128xf32> -> vector<8x128xf32>
    %12 = vector.broadcast %10 : vector<1x128xf32> to vector<8x128xf32>
    %13 = arith.addf %11, %12 : vector<8x128xf32>
    %cst_11 = arith.constant 0.000000e+00 : f32
    %14 = vector.broadcast %cst_11 : f32 to vector<8x128xf32>
    %15 = arith.maximumf %13, %14 : vector<8x128xf32>
    %16 = arith.truncf %15 : vector<8x128xf32> to vector<8x128xbf16>
    %c0_12 = arith.constant 0 : index
    %c0_13 = arith.constant 0 : index
    %17 = vector.load %arg6[%c0_12, %c0_13] : memref<128x128xbf16, #tpu.memory_space<vmem>>, vector<128x128xbf16>
    %c0_14 = arith.constant 0 : index
    %c0_15 = arith.constant 0 : index
    %18 = vector.load %arg7[%c0_14, %c0_15] : memref<1x128xf32, #tpu.memory_space<vmem>>, vector<1x128xf32>
    %cst_16 = arith.constant dense<0.000000e+00> : vector<8x128xf32>
    %19 = tpu.matmul %16, %17, %cst_16 {dimension_numbers = #tpu.dot_dimension_numbers<[1], [0], [0], [1], [0, 0, 1, 1], [], []>} : vector<8x128xbf16>, vector<128x128xbf16>, vector<8x128xf32> -> vector<8x128xf32>
    %20 = vector.broadcast %18 : vector<1x128xf32> to vector<8x128xf32>
    %21 = arith.addf %19, %20 : vector<8x128xf32>
    %c0_17 = arith.constant 0 : index
    %c0_18 = arith.constant 0 : index
    %22 = vector.load %arg8[%c0_17, %c0_18] : memref<8x128xf32, #tpu.memory_space<vmem>>, vector<8x128xf32>
    tpu.vector_store %arg8[%c0_17, %c0_18], %21 {strides = array<i32>} : memref<8x128xf32, #tpu.memory_space<vmem>>, vector<8x128xf32>,
    return
  }
  func.func @transform_0(%arg0: i32) -> (i32, i32) {
    %c0_i32 = arith.constant 0 : i32
    %c0_i32_0 = arith.constant 0 : i32
    return %arg0, %c0_i32 : i32, i32
  }
  func.func @transform_1(%arg0: i32) -> (i32, i32) {
    %c0_i32 = arith.constant 0 : i32
    %c0_i32_0 = arith.constant 0 : i32
    %c0_i32_1 = arith.constant 0 : i32
    return %c0_i32, %c0_i32_0 : i32, i32
  }
  func.func @transform_2(%arg0: i32) -> (i32, i32) {
    %c0_i32 = arith.constant 0 : i32
    %c0_i32_0 = arith.constant 0 : i32
    %c0_i32_1 = arith.constant 0 : i32
    return %c0_i32, %c0_i32_0 : i32, i32
  }
  func.func @transform_3(%arg0: i32) -> (i32, i32) {
    %c0_i32 = arith.constant 0 : i32
    %c0_i32_0 = arith.constant 0 : i32
    %c0_i32_1 = arith.constant 0 : i32
    return %c0_i32, %c0_i32_0 : i32, i32
  }
  func.func @transform_4(%arg0: i32) -> (i32, i32) {
    %c0_i32 = arith.constant 0 : i32
    %c0_i32_0 = arith.constant 0 : i32
    %c0_i32_1 = arith.constant 0 : i32
    return %c0_i32, %c0_i32_0 : i32, i32
  }
  func.func @transform_5(%arg0: i32) -> (i32, i32) {
    %c0_i32 = arith.constant 0 : i32
    %c0_i32_0 = arith.constant 0 : i32
    %c0_i32_1 = arith.constant 0 : i32
    return %c0_i32, %c0_i32_0 : i32, i32
  }
  func.func @transform_6(%arg0: i32) -> (i32, i32) {
    %c0_i32 = arith.constant 0 : i32
    %c0_i32_0 = arith.constant 0 : i32
    %c0_i32_1 = arith.constant 0 : i32
    return %c0_i32, %c0_i32_0 : i32, i32
  }
  func.func @transform_7(%arg0: i32) -> (i32, i32) {
    %c0_i32 = arith.constant 0 : i32
    %c0_i32_0 = arith.constant 0 : i32
    return %arg0, %c0_i32 : i32, i32
  }
}

</mosaic_0001>

<llo_original>
// kernel: tpu_custom_call.1
$region0: #{tpu_custom_call.1}
  #allocation0 [shape = 'u32[]', space=smem, size = 0x4, offset = 0x4, fixed_abs, tag = 'smem constant byte address 0x4 - core index']
  #allocation1 [shape = 'u32[144,128]{1,0:T(1,128)}', space=vmem, size = 0x12000, scoped, tag = 'internal scratch']
  %s0 = inlined_call_operand.hbm [shape: bf16[16,128], index: 0, kind: input, shape index: {}]
  %s1 = inlined_call_operand.hbm [shape: bf16[128,128], index: 1, kind: input, shape index: {}]
  %s2 = inlined_call_operand.vmem [shape: f32[1,128], index: 2, kind: input, shape index: {}]
  %s3 = inlined_call_operand.hbm [shape: bf16[128,128], index: 3, kind: input, shape index: {}]
  %s4 = inlined_call_operand.vmem [shape: f32[1,128], index: 4, kind: input, shape index: {}]
  %s5 = inlined_call_operand.hbm [shape: bf16[128,128], index: 5, kind: input, shape index: {}]
  %s6 = inlined_call_operand.vmem [shape: f32[1,128], index: 6, kind: input, shape index: {}]
  %s7 = inlined_call_operand.hbm [shape: f32[16,128], index: 7, kind: output, shape index: {}]
  %s8 = sld [smem:[#allocation0]]
  $region77: #{tpu_custom_call.1} parent=0
    _
  %s10 = ssub.s32 1, %s8
  %s11 = scalar_select 0, %s10, %s8
  $region1: #{tpu_custom_call.1} parent=0
    #allocation2 [shape = 'u8[4096]{0}', space=vmem, size = 0x1000, scoped, tag = 'input window, operand 0']
    #allocation3 [shape = 's32[2]{0}', space=sflag, size = 0x8, scoped, tag = 'scoped memory for tpu_custom_call.1']
    #allocation4 [shape = 's32[2]{0}', space=sflag, size = 0x8, scoped, tag = 'scoped memory for tpu_custom_call.1']
    #allocation5 [shape = 'u8[32768]{0}', space=vmem, size = 0x8000, scoped, tag = 'input window, operand 1, single buffered']
    #allocation6 [shape = 's32[1]{0}', space=sflag, size = 0x4, scoped, tag = 'scoped memory for tpu_custom_call.1']
    #allocation7 [shape = 'u8[32768]{0}', space=vmem, size = 0x8000, scoped, tag = 'input window, operand 3, single buffered']
    #allocation8 [shape = 'u8[32768]{0}', space=vmem, size = 0x8000, scoped, tag = 'input window, operand 5, single buffered']
    #allocation9 [shape = 's32[1]{0}', space=sflag, size = 0x4, scoped, tag = 'scoped memory for tpu_custom_call.1']
    #allocation10 [shape = 'u8[8192]{0}', space=vmem, size = 0x2000, scoped, tag = 'output window, operand 0']
    %12 = vsyncpa [#allocation3], 0
    %s13 = scalar_lea.sflag [#allocation3], 1
    %14 = vsyncpa %s13, 0
    %15 = vsyncpa [#allocation6], 0
    %16 = vsyncpa [#allocation9], 0
    %17 = vsyncpa [#allocation4], 0
    %s18 = scalar_lea.sflag [#allocation4], 1
    %19 = vsyncpa %s18, 0
    loop: start=0, step=1, limit=4
    $region2: #{tpu_custom_call.1} parent=1 // loop_pre_header
      _
    $region3: #{tpu_custom_call.1} parent=1 // loop_header
      %s21 = sphi 0, %s25
      %p22 = scmp.ge.s32.totalorder %s21, 4
      %s31 = sphi 0, %s33
      %s34 = sphi 0, %s31
      %s35 = sphi 0, %s34
      %s51 = sphi 0, %s35
      %s55 = sphi 0, %s55
      %s57 = sphi 0, %s55
      %s58 = sphi 0, %s57
      %s72 = sphi 0, %s58
      %s76 = sphi 0, %s76
      %s78 = sphi 0, %s76
      %s79 = sphi 0, %s78
      %s93 = sphi 0, %s79
      %s97 = sphi 0, %s97
      %s99 = sphi 0, %s97
      %s100 = sphi 0, %s99
      %s114 = sphi 0, %s100
      %s118 = sphi 0, %s118
      %s120 = sphi 0, %s118
      %s121 = sphi 0, %s120
      %s135 = sphi 0, %s121
      %s139 = sphi 0, %s139
      %s141 = sphi 0, %s139
      %s142 = sphi 0, %s141
      %s156 = sphi 0, %s142
      %s160 = sphi 0, %s160
      %s162 = sphi 0, %s160
      %s163 = sphi 0, %s162
      %s177 = sphi 0, %s163
      %s183 = sphi 0, %s185
      %s186 = sphi 0, %s183
      %s187 = sphi 0, %s186
      %s203 = sphi 0, %s187
    $region4: #{tpu_custom_call.1} parent=1 // loop_header_branch
      %24 = sbr.rel (%p22) target = $region8
    $region5: #{tpu_custom_call.1} parent=1 // loop_body
      %s26 = ssub.s32 %s21, 1
      %s27 = ssub.s32 %s21, 2
      %s28 = sadd.s32 %s21, 1
      %s29 = ssub.s32 %s21, %s28
      %p30 = scmp.eq.s32.totalorder %s29, 0
      %s32 = sadd.s32 %s31, 1
      %s33 = scalar_select %p30, %s31, %s32
      %p36 = pneg %p30
      %p37 = scmp.eq.s32.totalorder %s21, 1
      %p38 = por %p36, %p37
      %p39 = scmp.ne.s32.totalorder %s31, %s34
      %p40 = scmp.eq.s32.totalorder %s21, 0
      %p41 = por %p39, %p40
      %p42 = scmp.ne.s32.totalorder %s31, %s34
      %p43 = scmp.eq.s32.totalorder %s26, 1
      %p44 = por %p42, %p43
      %p45 = scmp.ne.s32.totalorder %s34, %s35
      %p46 = scmp.eq.s32.totalorder %s26, 0
      %p47 = por %p45, %p46
      %p48 = scmp.ne.s32.totalorder %s34, %s35
      %p49 = scmp.eq.s32.totalorder %s27, 1
      %p50 = por %p48, %p49
      %p52 = scmp.ne.s32.totalorder %s35, %s51
      %p53 = scmp.eq.s32.totalorder %s27, 0
      %p54 = por %p52, %p53
      %s56 = sadd.s32 %s55, 1
      %p59 = scmp.eq.s32.totalorder %s21, 1
      %p60 = scmp.ne.s32.totalorder %s55, %s57
      %p61 = scmp.eq.s32.totalorder %s21, 0
      %p62 = por %p60, %p61
      %p63 = scmp.ne.s32.totalorder %s55, %s57
      %p64 = scmp.eq.s32.totalorder %s26, 1
      %p65 = por %p63, %p64
      %p66 = scmp.ne.s32.totalorder %s57, %s58
      %p67 = scmp.eq.s32.totalorder %s26, 0
      %p68 = por %p66, %p67
      %p69 = scmp.ne.s32.totalorder %s57, %s58
      %p70 = scmp.eq.s32.totalorder %s27, 1
      %p71 = por %p69, %p70
      %p73 = scmp.ne.s32.totalorder %s58, %s72
      %p74 = scmp.eq.s32.totalorder %s27, 0
      %p75 = por %p73, %p74
      %s77 = sadd.s32 %s76, 1
      %p80 = scmp.eq.s32.totalorder %s21, 1
      %p81 = scmp.ne.s32.totalorder %s76, %s78
      %p82 = scmp.eq.s32.totalorder %s21, 0
      %p83 = por %p81, %p82
      %p84 = scmp.ne.s32.totalorder %s76, %s78
      %p85 = scmp.eq.s32.totalorder %s26, 1
      %p86 = por %p84, %p85
      %p87 = scmp.ne.s32.totalorder %s78, %s79
      %p88 = scmp.eq.s32.totalorder %s26, 0
      %p89 = por %p87, %p88
      %p90 = scmp.ne.s32.totalorder %s78, %s79
      %p91 = scmp.eq.s32.totalorder %s27, 1
      %p92 = por %p90, %p91
      %p94 = scmp.ne.s32.totalorder %s79, %s93
      %p95 = scmp.eq.s32.totalorder %s27, 0
      %p96 = por %p94, %p95
      %s98 = sadd.s32 %s97, 1
      %p101 = scmp.eq.s32.totalorder %s21, 1
      %p102 = scmp.ne.s32.totalorder %s97, %s99
      %p103 = scmp.eq.s32.totalorder %s21, 0
      %p104 = por %p102, %p103
      %p105 = scmp.ne.s32.totalorder %s97, %s99
      %p106 = scmp.eq.s32.totalorder %s26, 1
      %p107 = por %p105, %p106
      %p108 = scmp.ne.s32.totalorder %s99, %s100
      %p109 = scmp.eq.s32.totalorder %s26, 0
      %p110 = por %p108, %p109
      %p111 = scmp.ne.s32.totalorder %s99, %s100
      %p112 = scmp.eq.s32.totalorder %s27, 1
      %p113 = por %p111, %p112
      %p115 = scmp.ne.s32.totalorder %s100, %s114
      %p116 = scmp.eq.s32.totalorder %s27, 0
      %p117 = por %p115, %p116
      %s119 = sadd.s32 %s118, 1
      %p122 = scmp.eq.s32.totalorder %s21, 1
      %p123 = scmp.ne.s32.totalorder %s118, %s120
      %p124 = scmp.eq.s32.totalorder %s21, 0
      %p125 = por %p123, %p124
      %p126 = scmp.ne.s32.totalorder %s118, %s120
      %p127 = scmp.eq.s32.totalorder %s26, 1
      %p128 = por %p126, %p127
      %p129 = scmp.ne.s32.totalorder %s120, %s121
      %p130 = scmp.eq.s32.totalorder %s26, 0
      %p131 = por %p129, %p130
      %p132 = scmp.ne.s32.totalorder %s120, %s121
      %p133 = scmp.eq.s32.totalorder %s27, 1
      %p134 = por %p132, %p133
      %p136 = scmp.ne.s32.totalorder %s121, %s135
      %p137 = scmp.eq.s32.totalorder %s27, 0
      %p138 = por %p136, %p137
      %s140 = sadd.s32 %s139, 1
      %p143 = scmp.eq.s32.totalorder %s21, 1
      %p144 = scmp.ne.s32.totalorder %s139, %s141
      %p145 = scmp.eq.s32.totalorder %s21, 0
      %p146 = por %p144, %p145
      %p147 = scmp.ne.s32.totalorder %s139, %s141
      %p148 = scmp.eq.s32.totalorder %s26, 1
      %p149 = por %p147, %p148
      %p150 = scmp.ne.s32.totalorder %s141, %s142
      %p151 = scmp.eq.s32.totalorder %s26, 0
      %p152 = por %p150, %p151
      %p153 = scmp.ne.s32.totalorder %s141, %s142
      %p154 = scmp.eq.s32.totalorder %s27, 1
      %p155 = por %p153, %p154
      %p157 = scmp.ne.s32.totalorder %s142, %s156
      %p158 = scmp.eq.s32.totalorder %s27, 0
      %p159 = por %p157, %p158
      %s161 = sadd.s32 %s160, 1
      %p164 = scmp.eq.s32.totalorder %s21, 1
      %p165 = scmp.ne.s32.totalorder %s160, %s162
      %p166 = scmp.eq.s32.totalorder %s21, 0
      %p167 = por %p165, %p166
      %p168 = scmp.ne.s32.totalorder %s160, %s162
      %p169 = scmp.eq.s32.totalorder %s26, 1
      %p170 = por %p168, %p169
      %p171 = scmp.ne.s32.totalorder %s162, %s163
      %p172 = scmp.eq.s32.totalorder %s26, 0
      %p173 = por %p171, %p172
      %p174 = scmp.ne.s32.totalorder %s162, %s163
      %p175 = scmp.eq.s32.totalorder %s27, 1
      %p176 = por %p174, %p175
      %p178 = scmp.ne.s32.totalorder %s163, %s177
      %p179 = scmp.eq.s32.totalorder %s27, 0
      %p180 = por %p178, %p179
      %s181 = ssub.s32 %s21, %s28
      %p182 = scmp.eq.s32.totalorder %s181, 0
      %s184 = sadd.s32 %s183, 1
      %s185 = scalar_select %p182, %s183, %s184
      %p188 = pneg %p182
      %p189 = scmp.eq.s32.totalorder %s21, 1
      %p190 = por %p188, %p189
      %p191 = scmp.ne.s32.totalorder %s183, %s186
      %p192 = scmp.eq.s32.totalorder %s21, 0
      %p193 = por %p191, %p192
      %p194 = scmp.ne.s32.totalorder %s183, %s186
      %p195 = scmp.eq.s32.totalorder %s26, 1
      %p196 = por %p194, %p195
      %p197 = scmp.ne.s32.totalorder %s186, %s187
      %p198 = scmp.eq.s32.totalorder %s26, 0
      %p199 = por %p197, %p198
      %p200 = scmp.ne.s32.totalorder %s186, %s187
      %p201 = scmp.eq.s32.totalorder %s27, 1
      %p202 = por %p200, %p201
      %p204 = scmp.ne.s32.totalorder %s187, %s203
      %p205 = scmp.eq.s32.totalorder %s27, 0
      %p206 = por %p204, %p205
      %p207 = scmp.le.s32.totalorder 1, %s21
      %p208 = scmp.lt.s32.totalorder %s21, 3
      %p209 = pnand %p207, %p208
      %p210 = pneg %p209
      // Predicated region
      $region9: #{tpu_custom_call.1} parent=5 // pred_check
        _
      $region10: #{tpu_custom_call.1} parent=5 // pred_check_branch
        %212 = sbr.rel (%p209) target = $region12
      $region11: #{tpu_custom_call.1} parent=5 // pred_region
        %s213 = ssub.s32 %s21, 1
        // Predicated region
        $region13: #{tpu_custom_call.1} parent=11 // pred_check
          %p214 = pneg %p68
        $region14: #{tpu_custom_call.1} parent=11 // pred_check_branch
          %216 = sbr.rel (%p214) target = $region16
        $region15: #{tpu_custom_call.1} parent=11 // pred_region
          %s218 = ssub.s32 1024, 1024
          %219 = vsyncadd [#allocation6], %s218
          %s220 = sshll.u32 [#allocation5], 4
          %s221 = int_to_ptr.vmem [resolvable:$true] %s220
          %226 = dma.hbm_to_vmem [thread:$0]  %s1, 1024, %s221, [#allocation6], 64, 64, 4
        $region16: #{tpu_custom_call.1} parent=11 // pred_fallthru
          _
        // Predicated region
        $region17: #{tpu_custom_call.1} parent=11 // pred_check
          %p227 = pneg %p89
        $region18: #{tpu_custom_call.1} parent=11 // pred_check_branch
          %229 = sbr.rel (%p227) target = $region20
        $region19: #{tpu_custom_call.1} parent=11 // pred_region
          _
        $region20: #{tpu_custom_call.1} parent=11 // pred_fallthru
          _
        // Predicated region
        $region21: #{tpu_custom_call.1} parent=11 // pred_check
          %p230 = pneg %p110
        $region22: #{tpu_custom_call.1} parent=11 // pred_check_branch
          %232 = sbr.rel (%p230) target = $region24
        $region23: #{tpu_custom_call.1} parent=11 // pred_region
          %s234 = ssub.s32 1024, 1024
          %235 = vsyncadd [#allocation6], %s234
          %s236 = sshll.u32 [#allocation7], 4
          %s237 = int_to_ptr.vmem [resolvable:$true] %s236
          %242 = dma.hbm_to_vmem [thread:$0]  %s3, 1024, %s237, [#allocation6], 64, 64, 4
        $region24: #{tpu_custom_call.1} parent=11 // pred_fallthru
          _
        // Predicated region
        $region25: #{tpu_custom_call.1} parent=11 // pred_check
          %p243 = pneg %p131
        $region26: #{tpu_custom_call.1} parent=11 // pred_check_branch
          %245 = sbr.rel (%p243) target = $region28
        $region27: #{tpu_custom_call.1} parent=11 // pred_region
          _
        $region28: #{tpu_custom_call.1} parent=11 // pred_fallthru
          _
        // Predicated region
        $region29: #{tpu_custom_call.1} parent=11 // pred_check
          %p246 = pneg %p152
        $region30: #{tpu_custom_call.1} parent=11 // pred_check_branch
          %248 = sbr.rel (%p246) target = $region32
        $region31: #{tpu_custom_call.1} parent=11 // pred_region
          %s250 = ssub.s32 1024, 1024
          %251 = vsyncadd [#allocation9], %s250
          %s252 = sshll.u32 [#allocation8], 4
          %s253 = int_to_ptr.vmem [resolvable:$true] %s252
          %258 = dma.hbm_to_vmem [thread:$0]  %s5, 1024, %s253, [#allocation9], 64, 64, 4
        $region32: #{tpu_custom_call.1} parent=11 // pred_fallthru
          _
        // Predicated region
        $region33: #{tpu_custom_call.1} parent=11 // pred_check
          %p259 = pneg %p173
        $region34: #{tpu_custom_call.1} parent=11 // pred_check_branch
          %261 = sbr.rel (%p259) target = $region36
        $region35: #{tpu_custom_call.1} parent=11 // pred_region
          _
        $region36: #{tpu_custom_call.1} parent=11 // pred_fallthru
          _
      $region12: #{tpu_custom_call.1} parent=5 // pred_fallthru
        _
      %p262 = scmp.lt.s32.totalorder %s21, 2
      // Predicated region
      $region37: #{tpu_custom_call.1} parent=5 // pred_check
        %p263 = pneg %p262
      $region38: #{tpu_custom_call.1} parent=5 // pred_check_branch
        %265 = sbr.rel (%p263) target = $region40
      $region39: #{tpu_custom_call.1} parent=5 // pred_region
        // Predicated region
        $region41: #{tpu_custom_call.1} parent=39 // pred_check
          %p266 = pneg %p41
        $region42: #{tpu_custom_call.1} parent=39 // pred_check_branch
          %268 = sbr.rel (%p266) target = $region44
        $region43: #{tpu_custom_call.1} parent=39 // pred_region
          %s269 = sand.u32 %s31, 1
          %s270 = scalar_lea.sflag [#allocation3], %s269
          %s271 = sand.u32 %s31, 1
          %s272 = smul.addr %s271, 4
          %s273 = scalar_lea.vmem [#allocation2], %s272
          %s275 = ssub.s32 64, 64
          %276 = vsyncadd %s270, %s275
          %s277 = smul.addr %s21, 64
          %s278 = scalar_lea.hbm %s0, %s277
          %s280 = sshll.u32 %s273, 4
          %s281 = int_to_ptr.vmem [resolvable:$true] %s280
          %283 = dma.hbm_to_vmem [thread:$0]  %s278, 64, %s281, %s270
        $region44: #{tpu_custom_call.1} parent=39 // pred_fallthru
          _
      $region40: #{tpu_custom_call.1} parent=5 // pred_fallthru
        _
      %p284 = scmp.le.s32.totalorder 1, %s21
      %p285 = scmp.lt.s32.totalorder %s21, 3
      %p286 = pnand %p284, %p285
      %p287 = pneg %p286
      // Predicated region
      $region45: #{tpu_custom_call.1} parent=5 // pred_check
        _
      $region46: #{tpu_custom_call.1} parent=5 // pred_check_branch
        %289 = sbr.rel (%p286) target = $region48
      $region47: #{tpu_custom_call.1} parent=5 // pred_region
        %s290 = ssub.s32 %s21, 1
        %s291 = sand.u32 %s34, 1
        %s292 = scalar_lea.sflag [#allocation3], %s291
        %s293 = sand.u32 %s34, 1
        %s294 = smul.addr %s293, 4
        %s295 = scalar_lea.vmem [#allocation2], %s294
        // Predicated region
        $region49: #{tpu_custom_call.1} parent=47 // pred_check
          %p296 = pneg %p47
        $region50: #{tpu_custom_call.1} parent=47 // pred_check_branch
          %298 = sbr.rel (%p296) target = $region52
        $region51: #{tpu_custom_call.1} parent=47 // pred_region
          %299 = dma.done %s292, 64
        $region52: #{tpu_custom_call.1} parent=47 // pred_fallthru
          _
        // Predicated region
        $region53: #{tpu_custom_call.1} parent=47 // pred_check
          %p300 = pneg %p68
        $region54: #{tpu_custom_call.1} parent=47 // pred_check_branch
          %302 = sbr.rel (%p300) target = $region56
        $region55: #{tpu_custom_call.1} parent=47 // pred_region
          %303 = dma.done [#allocation6], 1024
        $region56: #{tpu_custom_call.1} parent=47 // pred_fallthru
          _
        // Predicated region
        $region57: #{tpu_custom_call.1} parent=47 // pred_check
          %p304 = pneg %p110
        $region58: #{tpu_custom_call.1} parent=47 // pred_check_branch
          %306 = sbr.rel (%p304) target = $region60
        $region59: #{tpu_custom_call.1} parent=47 // pred_region
          %307 = dma.done [#allocation6], 1024
        $region60: #{tpu_custom_call.1} parent=47 // pred_fallthru
          _
        // Predicated region
        $region61: #{tpu_custom_call.1} parent=47 // pred_check
          %p308 = pneg %p152
        $region62: #{tpu_custom_call.1} parent=47 // pred_check_branch
          %310 = sbr.rel (%p308) target = $region64
        $region63: #{tpu_custom_call.1} parent=47 // pred_region
          %311 = dma.done [#allocation9], 1024
        $region64: #{tpu_custom_call.1} parent=47 // pred_fallthru
          _
        %s312 = sand.u32 %s34, 1
        %s313 = scalar_lea.sflag [#allocation3], %s312
        %s314 = sand.u32 %s34, 1
        %s315 = smul.addr %s314, 4
        %s316 = scalar_lea.vmem [#allocation2], %s315
        %p317 = pneg %p47
        %p318 = pneg %p44
        %p319 = pneg %p68
        %p320 = pneg %p65
        %p321 = pneg %p89
        %p322 = pneg %p86
        %p323 = pneg %p110
        %p324 = pneg %p107
        %p325 = pneg %p131
        %p326 = pneg %p128
        %p327 = pneg %p152
        %p328 = pneg %p149
        %p329 = pneg %p173
        %p330 = pneg %p170
        %p331 = pneg %p199
        %p332 = pneg %p196
        %s333 = sand.u32 %s186, 1
        %s334 = scalar_lea.sflag [#allocation4], %s333
        %s335 = sand.u32 %s186, 1
        %s336 = smul.addr %s335, 8
        %s337 = scalar_lea.vmem [#allocation10], %s336
        %v339 = vld [vmem:[%s295] sm:$0xf]
        %v340 = vld [vmem:[#allocation5] sm:$0xf]
        %v341 = vld [vmem:[#allocation5 + $0x4] sm:$0xf]
        %v342 = vld [vmem:[#allocation5 + $0x8] sm:$0xf]
        %v343 = vld [vmem:[#allocation5 + $0xc] sm:$0xf]
        %v344 = vld [vmem:[#allocation5 + $0x10] sm:$0xf]
        %v345 = vld [vmem:[#allocation5 + $0x14] sm:$0xf]
        %v346 = vld [vmem:[#allocation5 + $0x18] sm:$0xf]
        %v347 = vld [vmem:[#allocation5 + $0x1c] sm:$0xf]
        %v348 = vld [vmem:[#allocation5 + $0x20] sm:$0xf]
        %v349 = vld [vmem:[#allocation5 + $0x24] sm:$0xf]
        %v350 = vld [vmem:[#allocation5 + $0x28] sm:$0xf]
        %v351 = vld [vmem:[#allocation5 + $0x2c] sm:$0xf]
        %v352 = vld [vmem:[#allocation5 + $0x30] sm:$0xf]
        %v353 = vld [vmem:[#allocation5 + $0x34] sm:$0xf]
        %v354 = vld [vmem:[#allocation5 + $0x38] sm:$0xf]
        %v355 = vld [vmem:[#allocation5 + $0x3c] sm:$0xf]
        %v356 = vld [vmem:[%s2] sm:$0x1]
        %v358 = vlaneseq
        %v359 = vshrl.u32 %v358, 7
        %v360 = vsub.s32 0, %v359
        %v361 = vrot.slane %v356, %v360
        %v379 = vunpack.c.l.b16 %v340
        %v380 = vunpack.c.l.b16 %v341
        %v381 = vunpack.c.l.b16 %v342
        %v382 = vunpack.c.l.b16 %v343
        %v383 = vunpack.c.l.b16 %v344
        %v384 = vunpack.c.l.b16 %v345
        %v385 = vunpack.c.l.b16 %v346
        %v386 = vunpack.c.l.b16 %v347
        %v387 = vunpack.c.l.b16 %v348
        %v388 = vunpack.c.l.b16 %v349
        %v389 = vunpack.c.l.b16 %v350
        %v390 = vunpack.c.l.b16 %v351
        %v391 = vunpack.c.l.b16 %v352
        %v392 = vunpack.c.l.b16 %v353
        %v393 = vunpack.c.l.b16 %v354
        %v394 = vunpack.c.l.b16 %v355
        %v395 = vpack.c.b16 %v380, %v379
        %v396 = vpack.c.b16 %v382, %v381
        %v397 = vpack.c.b16 %v384, %v383
        %v398 = vpack.c.b16 %v386, %v385
        %v399 = vpack.c.b16 %v388, %v387
        %v400 = vpack.c.b16 %v390, %v389
        %v401 = vpack.c.b16 %v392, %v391
        %v402 = vpack.c.b16 %v394, %v393
        %411 = vmatprep.subr.bf16.mxu0 0
        %412 = vmatpush1.bf16.msra.mxu0 %v395
        %413 = vmatprep.subr.bf16.mxu0 0
        %414 = vmatpush1.bf16.msra.mxu0 %v396
        %415 = vmatprep.subr.bf16.mxu0 0
        %416 = vmatpush1.bf16.msra.mxu0 %v397
        %417 = vmatprep.subr.bf16.mxu0 0
        %418 = vmatpush1.bf16.msra.mxu0 %v398
        %419 = vmatprep.subr.bf16.mxu0 0
        %420 = vmatpush1.bf16.msra.mxu0 %v399
        %421 = vmatprep.subr.bf16.mxu0 0
        %422 = vmatpush1.bf16.msra.mxu0 %v400
        %423 = vmatprep.subr.bf16.mxu0 0
        %424 = vmatpush1.bf16.msra.mxu0 %v401
        %425 = vmatprep.subr.bf16.mxu0 0
        %426 = vmatpush1.bf16.msra.mxu0 %v402
        %427 = vmatprep.subr.bf16.mxu0 0
        %428 = vmatpush1.bf16.msra.mxu0 0
        %429 = vmatprep.subr.bf16.mxu0 0
        %430 = vmatpush1.bf16.msra.mxu0 0
        %431 = vmatprep.subr.bf16.mxu0 0
        %432 = vmatpush1.bf16.msra.mxu0 0
        %433 = vmatprep.subr.bf16.mxu0 0
        %434 = vmatpush1.bf16.msra.mxu0 0
        %435 = vmatprep.subr.bf16.mxu0 0
        %436 = vmatpush1.bf16.msra.mxu0 0
        %437 = vmatprep.subr.bf16.mxu0 0
        %438 = vmatpush1.bf16.msra.mxu0 0
        %439 = vmatprep.subr.bf16.mxu0 0
        %440 = vmatpush1.bf16.msra.mxu0 0
        %441 = vmatprep.subr.bf16.mxu0 0
        %442 = vmatpush1.bf16.msra.mxu0 0
        %443 = vmatprep.mubr.bf16.mxu0 0
        %444 = vmatmul.mubr.bf16.gmra.mrb[0].mxu0 %v339
        %v445 = vpop.f32.mrb[0].mxu0
        %v446 = vadd.f32 %v361, %v445
        %v447 = vpop.f32.mrb[0].mxu0
        %v448 = vpop.f32.mrb[0].mxu0
        %v449 = vpop.f32.mrb[0].mxu0
        %450 = vdwg.mxu0
        %v451 = vmax.f32 %v446, 0.0
        %v452 = vpack.c.bf16 %v451, %v451
        %v453 = vld [vmem:[#allocation7] sm:$0xf]
        %v454 = vld [vmem:[#allocation7 + $0x4] sm:$0xf]
        %v455 = vld [vmem:[#allocation7 + $0x8] sm:$0xf]
        %v456 = vld [vmem:[#allocation7 + $0xc] sm:$0xf]
        %v457 = vld [vmem:[#allocation7 + $0x10] sm:$0xf]
        %v458 = vld [vmem:[#allocation7 + $0x14] sm:$0xf]
        %v459 = vld [vmem:[#allocation7 + $0x18] sm:$0xf]
        %v460 = vld [vmem:[#allocation7 + $0x1c] sm:$0xf]
        %v461 = vld [vmem:[#allocation7 + $0x20] sm:$0xf]
        %v462 = vld [vmem:[#allocation7 + $0x24] sm:$0xf]
        %v463 = vld [vmem:[#allocation7 + $0x28] sm:$0xf]
        %v464 = vld [vmem:[#allocation7 + $0x2c] sm:$0xf]
        %v465 = vld [vmem:[#allocation7 + $0x30] sm:$0xf]
        %v466 = vld [vmem:[#allocation7 + $0x34] sm:$0xf]
        %v467 = vld [vmem:[#allocation7 + $0x38] sm:$0xf]
        %v468 = vld [vmem:[#allocation7 + $0x3c] sm:$0xf]
        %v469 = vld [vmem:[%s4] sm:$0x1]
        %v471 = vlaneseq
        %v472 = vshrl.u32 %v471, 7
        %v473 = vsub.s32 0, %v472
        %v474 = vrot.slane %v469, %v473
        %v492 = vunpack.c.l.b16 %v453
        %v493 = vunpack.c.l.b16 %v454
        %v494 = vunpack.c.l.b16 %v455
        %v495 = vunpack.c.l.b16 %v456
        %v496 = vunpack.c.l.b16 %v457
        %v497 = vunpack.c.l.b16 %v458
        %v498 = vunpack.c.l.b16 %v459
        %v499 = vunpack.c.l.b16 %v460
        %v500 = vunpack.c.l.b16 %v461
        %v501 = vunpack.c.l.b16 %v462
        %v502 = vunpack.c.l.b16 %v463
        %v503 = vunpack.c.l.b16 %v464
        %v504 = vunpack.c.l.b16 %v465
        %v505 = vunpack.c.l.b16 %v466
        %v506 = vunpack.c.l.b16 %v467
        %v507 = vunpack.c.l.b16 %v468
        %v508 = vpack.c.b16 %v493, %v492
        %v509 = vpack.c.b16 %v495, %v494
        %v510 = vpack.c.b16 %v497, %v496
        %v511 = vpack.c.b16 %v499, %v498
        %v512 = vpack.c.b16 %v501, %v500
        %v513 = vpack.c.b16 %v503, %v502
        %v514 = vpack.c.b16 %v505, %v504
        %v515 = vpack.c.b16 %v507, %v506
        %524 = vmatprep.subr.bf16.mxu0 0
        %525 = vmatpush1.bf16.msra.mxu0 %v508
        %526 = vmatprep.subr.bf16.mxu0 0
        %527 = vmatpush1.bf16.msra.mxu0 %v509
        %528 = vmatprep.subr.bf16.mxu0 0
        %529 = vmatpush1.bf16.msra.mxu0 %v510
        %530 = vmatprep.subr.bf16.mxu0 0
        %531 = vmatpush1.bf16.msra.mxu0 %v511
        %532 = vmatprep.subr.bf16.mxu0 0
        %533 = vmatpush1.bf16.msra.mxu0 %v512
        %534 = vmatprep.subr.bf16.mxu0 0
        %535 = vmatpush1.bf16.msra.mxu0 %v513
        %536 = vmatprep.subr.bf16.mxu0 0
        %537 = vmatpush1.bf16.msra.mxu0 %v514
        %538 = vmatprep.subr.bf16.mxu0 0
        %539 = vmatpush1.bf16.msra.mxu0 %v515
        %540 = vmatprep.subr.bf16.mxu0 0
        %541 = vmatpush1.bf16.msra.mxu0 0
        %542 = vmatprep.subr.bf16.mxu0 0
        %543 = vmatpush1.bf16.msra.mxu0 0
        %544 = vmatprep.subr.bf16.mxu0 0
        %545 = vmatpush1.bf16.msra.mxu0 0
        %546 = vmatprep.subr.bf16.mxu0 0
        %547 = vmatpush1.bf16.msra.mxu0 0
        %548 = vmatprep.subr.bf16.mxu0 0
        %549 = vmatpush1.bf16.msra.mxu0 0
        %550 = vmatprep.subr.bf16.mxu0 0
        %551 = vmatpush1.bf16.msra.mxu0 0
        %552 = vmatprep.subr.bf16.mxu0 0
        %553 = vmatpush1.bf16.msra.mxu0 0
        %554 = vmatprep.subr.bf16.mxu0 0
        %555 = vmatpush1.bf16.msra.mxu0 0
        %556 = vmatprep.mubr.bf16.mxu0 0
        %557 = vmatmul.mubr.bf16.gmra.mrb[0].mxu0 %v452
        %v558 = vpop.f32.mrb[0].mxu0
        %v559 = vadd.f32 %v474, %v558
        %v560 = vpop.f32.mrb[0].mxu0
        %v561 = vpop.f32.mrb[0].mxu0
        %v562 = vpop.f32.mrb[0].mxu0
        %563 = vdwg.mxu0
        %v564 = vmax.f32 %v559, 0.0
        %v565 = vpack.c.bf16 %v564, %v564
        %v566 = vld [vmem:[#allocation8] sm:$0xf]
        %v567 = vld [vmem:[#allocation8 + $0x4] sm:$0xf]
        %v568 = vld [vmem:[#allocation8 + $0x8] sm:$0xf]
        %v569 = vld [vmem:[#allocation8 + $0xc] sm:$0xf]
        %v570 = vld [vmem:[#allocation8 + $0x10] sm:$0xf]
        %v571 = vld [vmem:[#allocation8 + $0x14] sm:$0xf]
        %v572 = vld [vmem:[#allocation8 + $0x18] sm:$0xf]
        %v573 = vld [vmem:[#allocation8 + $0x1c] sm:$0xf]
        %v574 = vld [vmem:[#allocation8 + $0x20] sm:$0xf]
        %v575 = vld [vmem:[#allocation8 + $0x24] sm:$0xf]
        %v576 = vld [vmem:[#allocation8 + $0x28] sm:$0xf]
        %v577 = vld [vmem:[#allocation8 + $0x2c] sm:$0xf]
        %v578 = vld [vmem:[#allocation8 + $0x30] sm:$0xf]
        %v579 = vld [vmem:[#allocation8 + $0x34] sm:$0xf]
        %v580 = vld [vmem:[#allocation8 + $0x38] sm:$0xf]
        %v581 = vld [vmem:[#allocation8 + $0x3c] sm:$0xf]
        %v582 = vld [vmem:[%s6] sm:$0x1]
        %v584 = vlaneseq
        %v585 = vshrl.u32 %v584, 7
        %v586 = vsub.s32 0, %v585
        %v587 = vrot.slane %v582, %v586
        %v605 = vunpack.c.l.b16 %v566
        %v606 = vunpack.c.l.b16 %v567
        %v607 = vunpack.c.l.b16 %v568
        %v608 = vunpack.c.l.b16 %v569
        %v609 = vunpack.c.l.b16 %v570
        %v610 = vunpack.c.l.b16 %v571
        %v611 = vunpack.c.l.b16 %v572
        %v612 = vunpack.c.l.b16 %v573
        %v613 = vunpack.c.l.b16 %v574
        %v614 = vunpack.c.l.b16 %v575
        %v615 = vunpack.c.l.b16 %v576
        %v616 = vunpack.c.l.b16 %v577
        %v617 = vunpack.c.l.b16 %v578
        %v618 = vunpack.c.l.b16 %v579
        %v619 = vunpack.c.l.b16 %v580
        %v620 = vunpack.c.l.b16 %v581
        %v621 = vpack.c.b16 %v606, %v605
        %v622 = vpack.c.b16 %v608, %v607
        %v623 = vpack.c.b16 %v610, %v609
        %v624 = vpack.c.b16 %v612, %v611
        %v625 = vpack.c.b16 %v614, %v613
        %v626 = vpack.c.b16 %v616, %v615
        %v627 = vpack.c.b16 %v618, %v617
        %v628 = vpack.c.b16 %v620, %v619
        %637 = vmatprep.subr.bf16.mxu0 0
        %638 = vmatpush1.bf16.msra.mxu0 %v621
        %639 = vmatprep.subr.bf16.mxu0 0
        %640 = vmatpush1.bf16.msra.mxu0 %v622
        %641 = vmatprep.subr.bf16.mxu0 0
        %642 = vmatpush1.bf16.msra.mxu0 %v623
        %643 = vmatprep.subr.bf16.mxu0 0
        %644 = vmatpush1.bf16.msra.mxu0 %v624
        %645 = vmatprep.subr.bf16.mxu0 0
        %646 = vmatpush1.bf16.msra.mxu0 %v625
        %647 = vmatprep.subr.bf16.mxu0 0
        %648 = vmatpush1.bf16.msra.mxu0 %v626
        %649 = vmatprep.subr.bf16.mxu0 0
        %650 = vmatpush1.bf16.msra.mxu0 %v627
        %651 = vmatprep.subr.bf16.mxu0 0
        %652 = vmatpush1.bf16.msra.mxu0 %v628
        %653 = vmatprep.subr.bf16.mxu0 0
        %654 = vmatpush1.bf16.msra.mxu0 0
        %655 = vmatprep.subr.bf16.mxu0 0
        %656 = vmatpush1.bf16.msra.mxu0 0
        %657 = vmatprep.subr.bf16.mxu0 0
        %658 = vmatpush1.bf16.msra.mxu0 0
        %659 = vmatprep.subr.bf16.mxu0 0
        %660 = vmatpush1.bf16.msra.mxu0 0
        %661 = vmatprep.subr.bf16.mxu0 0
        %662 = vmatpush1.bf16.msra.mxu0 0
        %663 = vmatprep.subr.bf16.mxu0 0
        %664 = vmatpush1.bf16.msra.mxu0 0
        %665 = vmatprep.subr.bf16.mxu0 0
        %666 = vmatpush1.bf16.msra.mxu0 0
        %667 = vmatprep.subr.bf16.mxu0 0
        %668 = vmatpush1.bf16.msra.mxu0 0
        %669 = vmatprep.mubr.bf16.mxu0 0
        %670 = vmatmul.mubr.bf16.gmra.mrb[0].mxu0 %v565
        %v671 = vpop.f32.mrb[0].mxu0
        %v672 = vadd.f32 %v587, %v671
        %v673 = vpop.f32.mrb[0].mxu0
        %v674 = vpop.f32.mrb[0].mxu0
        %v675 = vpop.f32.mrb[0].mxu0
        %676 = vdwg.mxu0
        %677 = vst [vmem:[%s337] sm:$0xff] %v672
        %s678 = sand.u32 %s186, 1
        %s679 = scalar_lea.sflag [#allocation4], %s678
        %s680 = sand.u32 %s186, 1
        %s681 = smul.addr %s680, 8
        %s682 = scalar_lea.vmem [#allocation10], %s681
        // Predicated region
        $region65: #{tpu_custom_call.1} parent=47 // pred_check
          %p683 = pneg %p196
        $region66: #{tpu_custom_call.1} parent=47 // pred_check_branch
          %685 = sbr.rel (%p683) target = $region68
        $region67: #{tpu_custom_call.1} parent=47 // pred_region
          %s687 = ssub.s32 128, 128
          %688 = vsyncadd %s679, %s687
          %s689 = smul.addr %s26, 128
          %s690 = scalar_lea.hbm %s7, %s689
          %s692 = sshll.u32 %s682, 4
          %s693 = int_to_ptr.vmem [resolvable:$true] %s692
          %695 = dma.vmem_to_hbm [thread:$0]  %s693, 128, %s690, %s679
        $region68: #{tpu_custom_call.1} parent=47 // pred_fallthru
          _
      $region48: #{tpu_custom_call.1} parent=5 // pred_fallthru
        _
      %p696 = scmp.le.s32.totalorder 2, %s21
      // Predicated region
      $region69: #{tpu_custom_call.1} parent=5 // pred_check
        %p697 = pneg %p696
      $region70: #{tpu_custom_call.1} parent=5 // pred_check_branch
        %699 = sbr.rel (%p697) target = $region72
      $region71: #{tpu_custom_call.1} parent=5 // pred_region
        %s700 = ssub.s32 %s21, 2
        // Predicated region
        $region73: #{tpu_custom_call.1} parent=71 // pred_check
          %p701 = pneg %p202
        $region74: #{tpu_custom_call.1} parent=71 // pred_check_branch
          %703 = sbr.rel (%p701) target = $region76
        $region75: #{tpu_custom_call.1} parent=71 // pred_region
          %s704 = sand.u32 %s187, 1
          %s705 = scalar_lea.sflag [#allocation4], %s704
          %s706 = sand.u32 %s187, 1
          %s707 = smul.addr %s706, 8
          %s708 = scalar_lea.vmem [#allocation10], %s707
          %709 = dma.done %s705, 128
        $region76: #{tpu_custom_call.1} parent=71 // pred_fallthru
          _
      $region72: #{tpu_custom_call.1} parent=5 // pred_fallthru
        _
    $region6: #{tpu_custom_call.1} parent=1 // loop_footer
      %s25 = sadd.s32 1, %s21
    $region7: #{tpu_custom_call.1} parent=1 // loop_footer_branch
      %20 = sbr.rel target = $region3
    $region8: #{tpu_custom_call.1} parent=1 // loop_exit
      _
    %710 = vsyncpa [#allocation3], 1
    %s711 = scalar_lea.sflag [#allocation3], 1
    %712 = vsyncpa %s711, 1
    %713 = vsyncpa [#allocation6], 1
    %714 = vsyncpa [#allocation9], 1
    %715 = vsyncpa [#allocation4], 1
    %s716 = scalar_lea.sflag [#allocation4], 1
    %717 = vsyncpa %s716, 1

// kernel: tpu_custom_call.1
$region0: #{tpu_custom_call.1}
  #allocation0 [shape = 'u32[]', space=smem, size = 0x4, offset = 0x4, fixed_abs, tag = 'smem constant byte address 0x4 - core index']
  #allocation1 [shape = 'u32[144,128]{1,0:T(1,128)}', space=vmem, size = 0x12000, scoped, tag = 'internal scratch']
  %s0 = inlined_call_operand.hbm [shape: bf16[16,128], index: 0, kind: input, shape index: {}]
  %s1 = inlined_call_operand.hbm [shape: bf16[128,128], index: 1, kind: input, shape index: {}]
  %s2 = inlined_call_operand.vmem [shape: f32[1,128], index: 2, kind: input, shape index: {}]
  %s3 = inlined_call_operand.hbm [shape: bf16[128,128], index: 3, kind: input, shape index: {}]
  %s4 = inlined_call_operand.vmem [shape: f32[1,128], index: 4, kind: input, shape index: {}]
  %s5 = inlined_call_operand.hbm [shape: bf16[128,128], index: 5, kind: input, shape index: {}]
  %s6 = inlined_call_operand.vmem [shape: f32[1,128], index: 6, kind: input, shape index: {}]
  %s7 = inlined_call_operand.hbm [shape: f32[16,128], index: 7, kind: output, shape index: {}]
  %s8 = sld [smem:[#allocation0]]
  $region77: #{tpu_custom_call.1} parent=0
    _
  %s10 = ssub.s32 1, %s8
  %s11 = scalar_select 0, %s10, %s8
  $region1: #{tpu_custom_call.1} parent=0
    #allocation2 [shape = 'u8[4096]{0}', space=vmem, size = 0x1000, scoped, tag = 'input window, operand 0']
    #allocation3 [shape = 's32[2]{0}', space=sflag, size = 0x8, scoped, tag = 'scoped memory for tpu_custom_call.1']
    #allocation4 [shape = 's32[2]{0}', space=sflag, size = 0x8, scoped, tag = 'scoped memory for tpu_custom_call.1']
    #allocation5 [shape = 'u8[32768]{0}', space=vmem, size = 0x8000, scoped, tag = 'input window, operand 1, single buffered']
    #allocation6 [shape = 's32[1]{0}', space=sflag, size = 0x4, scoped, tag = 'scoped memory for tpu_custom_call.1']
    #allocation7 [shape = 'u8[32768]{0}', space=vmem, size = 0x8000, scoped, tag = 'input window, operand 3, single buffered']
    #allocation8 [shape = 'u8[32768]{0}', space=vmem, size = 0x8000, scoped, tag = 'input window, operand 5, single buffered']
    #allocation9 [shape = 's32[1]{0}', space=sflag, size = 0x4, scoped, tag = 'scoped memory for tpu_custom_call.1']
    #allocation10 [shape = 'u8[8192]{0}', space=vmem, size = 0x2000, scoped, tag = 'output window, operand 0']
    %12 = vsyncpa [#allocation3], 0
    %s13 = scalar_lea.sflag [#allocation3], 1
    %14 = vsyncpa %s13, 0
    %15 = vsyncpa [#allocation6], 0
    %16 = vsyncpa [#allocation9], 0
    %17 = vsyncpa [#allocation4], 0
    %s18 = scalar_lea.sflag [#allocation4], 1
    %19 = vsyncpa %s18, 0
    loop: start=0, step=1, limit=4
    $region2: #{tpu_custom_call.1} parent=1 // loop_pre_header
      _
    $region3: #{tpu_custom_call.1} parent=1 // loop_header
      %s21 = sphi 0, %s25
      %p22 = scmp.ge.s32.totalorder %s21, 4
      %s31 = sphi 0, %s33
      %s34 = sphi 0, %s31
      %s35 = sphi 0, %s34
      %s51 = sphi 0, %s35
      %s55 = sphi 0, %s55
      %s57 = sphi 0, %s55
      %s58 = sphi 0, %s57
      %s72 = sphi 0, %s58
      %s76 = sphi 0, %s76
      %s78 = sphi 0, %s76
      %s79 = sphi 0, %s78
      %s93 = sphi 0, %s79
      %s97 = sphi 0, %s97
      %s99 = sphi 0, %s97
      %s100 = sphi 0, %s99
      %s114 = sphi 0, %s100
      %s118 = sphi 0, %s118
      %s120 = sphi 0, %s118
      %s121 = sphi 0, %s120
      %s135 = sphi 0, %s121
      %s139 = sphi 0, %s139
      %s141 = sphi 0, %s139
      %s142 = sphi 0, %s141
      %s156 = sphi 0, %s142
      %s160 = sphi 0, %s160
      %s162 = sphi 0, %s160
      %s163 = sphi 0, %s162
      %s177 = sphi 0, %s163
      %s183 = sphi 0, %s185
      %s186 = sphi 0, %s183
      %s187 = sphi 0, %s186
      %s203 = sphi 0, %s187
    $region4: #{tpu_custom_call.1} parent=1 // loop_header_branch
      %24 = sbr.rel (%p22) target = $region8
    $region5: #{tpu_custom_call.1} parent=1 // loop_body
      %s26 = ssub.s32 %s21, 1
      %s27 = ssub.s32 %s21, 2
      %s28 = sadd.s32 %s21, 1
      %s29 = ssub.s32 %s21, %s28
      %p30 = scmp.eq.s32.totalorder %s29, 0
      %s32 = sadd.s32 %s31, 1
      %s33 = scalar_select %p30, %s31, %s32
      %p36 = pneg %p30
      %p37 = scmp.eq.s32.totalorder %s21, 1
      %p38 = por %p36, %p37
      %p39 = scmp.ne.s32.totalorder %s31, %s34
      %p40 = scmp.eq.s32.totalorder %s21, 0
      %p41 = por %p39, %p40
      %p42 = scmp.ne.s32.totalorder %s31, %s34
      %p43 = scmp.eq.s32.totalorder %s26, 1
      %p44 = por %p42, %p43
      %p45 = scmp.ne.s32.totalorder %s34, %s35
      %p46 = scmp.eq.s32.totalorder %s26, 0
      %p47 = por %p45, %p46
      %p48 = scmp.ne.s32.totalorder %s34, %s35
      %p49 = scmp.eq.s32.totalorder %s27, 1
      %p50 = por %p48, %p49
      %p52 = scmp.ne.s32.totalorder %s35, %s51
      %p53 = scmp.eq.s32.totalorder %s27, 0
      %p54 = por %p52, %p53
      %s56 = sadd.s32 %s55, 1
      %p59 = scmp.eq.s32.totalorder %s21, 1
      %p60 = scmp.ne.s32.totalorder %s55, %s57
      %p61 = scmp.eq.s32.totalorder %s21, 0
      %p62 = por %p60, %p61
      %p63 = scmp.ne.s32.totalorder %s55, %s57
      %p64 = scmp.eq.s32.totalorder %s26, 1
      %p65 = por %p63, %p64
      %p66 = scmp.ne.s32.totalorder %s57, %s58
      %p67 = scmp.eq.s32.totalorder %s26, 0
      %p68 = por %p66, %p67
      %p69 = scmp.ne.s32.totalorder %s57, %s58
      %p70 = scmp.eq.s32.totalorder %s27, 1
      %p71 = por %p69, %p70
      %p73 = scmp.ne.s32.totalorder %s58, %s72
      %p74 = scmp.eq.s32.totalorder %s27, 0
      %p75 = por %p73, %p74
      %s77 = sadd.s32 %s76, 1
      %p80 = scmp.eq.s32.totalorder %s21, 1
      %p81 = scmp.ne.s32.totalorder %s76, %s78
      %p82 = scmp.eq.s32.totalorder %s21, 0
      %p83 = por %p81, %p82
      %p84 = scmp.ne.s32.totalorder %s76, %s78
      %p85 = scmp.eq.s32.totalorder %s26, 1
      %p86 = por %p84, %p85
      %p87 = scmp.ne.s32.totalorder %s78, %s79
      %p88 = scmp.eq.s32.totalorder %s26, 0
      %p89 = por %p87, %p88
      %p90 = scmp.ne.s32.totalorder %s78, %s79
      %p91 = scmp.eq.s32.totalorder %s27, 1
      %p92 = por %p90, %p91
      %p94 = scmp.ne.s32.totalorder %s79, %s93
      %p95 = scmp.eq.s32.totalorder %s27, 0
      %p96 = por %p94, %p95
      %s98 = sadd.s32 %s97, 1
      %p101 = scmp.eq.s32.totalorder %s21, 1
      %p102 = scmp.ne.s32.totalorder %s97, %s99
      %p103 = scmp.eq.s32.totalorder %s21, 0
      %p104 = por %p102, %p103
      %p105 = scmp.ne.s32.totalorder %s97, %s99
      %p106 = scmp.eq.s32.totalorder %s26, 1
      %p107 = por %p105, %p106
      %p108 = scmp.ne.s32.totalorder %s99, %s100
      %p109 = scmp.eq.s32.totalorder %s26, 0
      %p110 = por %p108, %p109
      %p111 = scmp.ne.s32.totalorder %s99, %s100
      %p112 = scmp.eq.s32.totalorder %s27, 1
      %p113 = por %p111, %p112
      %p115 = scmp.ne.s32.totalorder %s100, %s114
      %p116 = scmp.eq.s32.totalorder %s27, 0
      %p117 = por %p115, %p116
      %s119 = sadd.s32 %s118, 1
      %p122 = scmp.eq.s32.totalorder %s21, 1
      %p123 = scmp.ne.s32.totalorder %s118, %s120
      %p124 = scmp.eq.s32.totalorder %s21, 0
      %p125 = por %p123, %p124
      %p126 = scmp.ne.s32.totalorder %s118, %s120
      %p127 = scmp.eq.s32.totalorder %s26, 1
      %p128 = por %p126, %p127
      %p129 = scmp.ne.s32.totalorder %s120, %s121
      %p130 = scmp.eq.s32.totalorder %s26, 0
      %p131 = por %p129, %p130
      %p132 = scmp.ne.s32.totalorder %s120, %s121
      %p133 = scmp.eq.s32.totalorder %s27, 1
      %p134 = por %p132, %p133
      %p136 = scmp.ne.s32.totalorder %s121, %s135
      %p137 = scmp.eq.s32.totalorder %s27, 0
      %p138 = por %p136, %p137
      %s140 = sadd.s32 %s139, 1
      %p143 = scmp.eq.s32.totalorder %s21, 1
      %p144 = scmp.ne.s32.totalorder %s139, %s141
      %p145 = scmp.eq.s32.totalorder %s21, 0
      %p146 = por %p144, %p145
      %p147 = scmp.ne.s32.totalorder %s139, %s141
      %p148 = scmp.eq.s32.totalorder %s26, 1
      %p149 = por %p147, %p148
      %p150 = scmp.ne.s32.totalorder %s141, %s142
      %p151 = scmp.eq.s32.totalorder %s26, 0
      %p152 = por %p150, %p151
      %p153 = scmp.ne.s32.totalorder %s141, %s142
      %p154 = scmp.eq.s32.totalorder %s27, 1
      %p155 = por %p153, %p154
      %p157 = scmp.ne.s32.totalorder %s142, %s156
      %p158 = scmp.eq.s32.totalorder %s27, 0
      %p159 = por %p157, %p158
      %s161 = sadd.s32 %s160, 1
      %p164 = scmp.eq.s32.totalorder %s21, 1
      %p165 = scmp.ne.s32.totalorder %s160, %s162
      %p166 = scmp.eq.s32.totalorder %s21, 0
      %p167 = por %p165, %p166
      %p168 = scmp.ne.s32.totalorder %s160, %s162
      %p169 = scmp.eq.s32.totalorder %s26, 1
      %p170 = por %p168, %p169
      %p171 = scmp.ne.s32.totalorder %s162, %s163
      %p172 = scmp.eq.s32.totalorder %s26, 0
      %p173 = por %p171, %p172
      %p174 = scmp.ne.s32.totalorder %s162, %s163
      %p175 = scmp.eq.s32.totalorder %s27, 1
      %p176 = por %p174, %p175
      %p178 = scmp.ne.s32.totalorder %s163, %s177
      %p179 = scmp.eq.s32.totalorder %s27, 0
      %p180 = por %p178, %p179
      %s181 = ssub.s32 %s21, %s28
      %p182 = scmp.eq.s32.totalorder %s181, 0
      %s184 = sadd.s32 %s183, 1
      %s185 = scalar_select %p182, %s183, %s184
      %p188 = pneg %p182
      %p189 = scmp.eq.s32.totalorder %s21, 1
      %p190 = por %p188, %p189
      %p191 = scmp.ne.s32.totalorder %s183, %s186
      %p192 = scmp.eq.s32.totalorder %s21, 0
      %p193 = por %p191, %p192
      %p194 = scmp.ne.s32.totalorder %s183, %s186
      %p195 = scmp.eq.s32.totalorder %s26, 1
      %p196 = por %p194, %p195
      %p197 = scmp.ne.s32.totalorder %s186, %s187
      %p198 = scmp.eq.s32.totalorder %s26, 0
      %p199 = por %p197, %p198
      %p200 = scmp.ne.s32.totalorder %s186, %s187
      %p201 = scmp.eq.s32.totalorder %s27, 1
      %p202 = por %p200, %p201
      %p204 = scmp.ne.s32.totalorder %s187, %s203
      %p205 = scmp.eq.s32.totalorder %s27, 0
      %p206 = por %p204, %p205
      %p207 = scmp.le.s32.totalorder 1, %s21
      %p208 = scmp.lt.s32.totalorder %s21, 3
      %p209 = pnand %p207, %p208
      %p210 = pneg %p209
      // Predicated region
      $region9: #{tpu_custom_call.1} parent=5 // pred_check
        _
      $region10: #{tpu_custom_call.1} parent=5 // pred_check_branch
        %212 = sbr.rel (%p209) target = $region12
      $region11: #{tpu_custom_call.1} parent=5 // pred_region
        %s213 = ssub.s32 %s21, 1
        // Predicated region
        $region13: #{tpu_custom_call.1} parent=11 // pred_check
          %p214 = pneg %p68
        $region14: #{tpu_custom_call.1} parent=11 // pred_check_branch
          %216 = sbr.rel (%p214) target = $region16
        $region15: #{tpu_custom_call.1} parent=11 // pred_region
          %s218 = ssub.s32 1024, 1024
          %219 = vsyncadd [#allocation6], %s218
          %s220 = sshll.u32 [#allocation5], 4
          %s221 = int_to_ptr.vmem [resolvable:$true] %s220
          %226 = dma.hbm_to_vmem [thread:$0]  %s1, 1024, %s221, [#allocation6], 64, 64, 4
        $region16: #{tpu_custom_call.1} parent=11 // pred_fallthru
          _
        // Predicated region
        $region17: #{tpu_custom_call.1} parent=11 // pred_check
          %p227 = pneg %p89
        $region18: #{tpu_custom_call.1} parent=11 // pred_check_branch
          %229 = sbr.rel (%p227) target = $region20
        $region19: #{tpu_custom_call.1} parent=11 // pred_region
          _
        $region20: #{tpu_custom_call.1} parent=11 // pred_fallthru
          _
        // Predicated region
        $region21: #{tpu_custom_call.1} parent=11 // pred_check
          %p230 = pneg %p110
        $region22: #{tpu_custom_call.1} parent=11 // pred_check_branch
          %232 = sbr.rel (%p230) target = $region24
        $region23: #{tpu_custom_call.1} parent=11 // pred_region
          %s234 = ssub.s32 1024, 1024
          %235 = vsyncadd [#allocation6], %s234
          %s236 = sshll.u32 [#allocation7], 4
          %s237 = int_to_ptr.vmem [resolvable:$true] %s236
          %242 = dma.hbm_to_vmem [thread:$0]  %s3, 1024, %s237, [#allocation6], 64, 64, 4
        $region24: #{tpu_custom_call.1} parent=11 // pred_fallthru
          _
        // Predicated region
        $region25: #{tpu_custom_call.1} parent=11 // pred_check
          %p243 = pneg %p131
        $region26: #{tpu_custom_call.1} parent=11 // pred_check_branch
          %245 = sbr.rel (%p243) target = $region28
        $region27: #{tpu_custom_call.1} parent=11 // pred_region
          _
        $region28: #{tpu_custom_call.1} parent=11 // pred_fallthru
          _
        // Predicated region
        $region29: #{tpu_custom_call.1} parent=11 // pred_check
          %p246 = pneg %p152
        $region30: #{tpu_custom_call.1} parent=11 // pred_check_branch
          %248 = sbr.rel (%p246) target = $region32
        $region31: #{tpu_custom_call.1} parent=11 // pred_region
          %s250 = ssub.s32 1024, 1024
          %251 = vsyncadd [#allocation9], %s250
          %s252 = sshll.u32 [#allocation8], 4
          %s253 = int_to_ptr.vmem [resolvable:$true] %s252
          %258 = dma.hbm_to_vmem [thread:$0]  %s5, 1024, %s253, [#allocation9], 64, 64, 4
        $region32: #{tpu_custom_call.1} parent=11 // pred_fallthru
          _
        // Predicated region
        $region33: #{tpu_custom_call.1} parent=11 // pred_check
          %p259 = pneg %p173
        $region34: #{tpu_custom_call.1} parent=11 // pred_check_branch
          %261 = sbr.rel (%p259) target = $region36
        $region35: #{tpu_custom_call.1} parent=11 // pred_region
          _
        $region36: #{tpu_custom_call.1} parent=11 // pred_fallthru
          _
      $region12: #{tpu_custom_call.1} parent=5 // pred_fallthru
        _
      %p262 = scmp.lt.s32.totalorder %s21, 2
      // Predicated region
      $region37: #{tpu_custom_call.1} parent=5 // pred_check
        %p263 = pneg %p262
      $region38: #{tpu_custom_call.1} parent=5 // pred_check_branch
        %265 = sbr.rel (%p263) target = $region40
      $region39: #{tpu_custom_call.1} parent=5 // pred_region
        // Predicated region
        $region41: #{tpu_custom_call.1} parent=39 // pred_check
          %p266 = pneg %p41
        $region42: #{tpu_custom_call.1} parent=39 // pred_check_branch
          %268 = sbr.rel (%p266) target = $region44
        $region43: #{tpu_custom_call.1} parent=39 // pred_region
          %s269 = sand.u32 %s31, 1
          %s270 = scalar_lea.sflag [#allocation3], %s269
          %s271 = sand.u32 %s31, 1
          %s272 = smul.addr %s271, 4
          %s273 = scalar_lea.vmem [#allocation2], %s272
          %s275 = ssub.s32 64, 64
          %276 = vsyncadd %s270, %s275
          %s277 = smul.addr %s21, 64
          %s278 = scalar_lea.hbm %s0, %s277
          %s280 = sshll.u32 %s273, 4
          %s281 = int_to_ptr.vmem [resolvable:$true] %s280
          %283 = dma.hbm_to_vmem [thread:$0]  %s278, 64, %s281, %s270
        $region44: #{tpu_custom_call.1} parent=39 // pred_fallthru
          _
      $region40: #{tpu_custom_call.1} parent=5 // pred_fallthru
        _
      %p284 = scmp.le.s32.totalorder 1, %s21
      %p285 = scmp.lt.s32.totalorder %s21, 3
      %p286 = pnand %p284, %p285
      %p287 = pneg %p286
      // Predicated region
      $region45: #{tpu_custom_call.1} parent=5 // pred_check
        _
      $region46: #{tpu_custom_call.1} parent=5 // pred_check_branch
        %289 = sbr.rel (%p286) target = $region48
      $region47: #{tpu_custom_call.1} parent=5 // pred_region
        %s290 = ssub.s32 %s21, 1
        %s291 = sand.u32 %s34, 1
        %s292 = scalar_lea.sflag [#allocation3], %s291
        %s293 = sand.u32 %s34, 1
        %s294 = smul.addr %s293, 4
        %s295 = scalar_lea.vmem [#allocation2], %s294
        // Predicated region
        $region49: #{tpu_custom_call.1} parent=47 // pred_check
          %p296 = pneg %p47
        $region50: #{tpu_custom_call.1} parent=47 // pred_check_branch
          %298 = sbr.rel (%p296) target = $region52
        $region51: #{tpu_custom_call.1} parent=47 // pred_region
          %299 = dma.done %s292, 64
        $region52: #{tpu_custom_call.1} parent=47 // pred_fallthru
          _
        // Predicated region
        $region53: #{tpu_custom_call.1} parent=47 // pred_check
          %p300 = pneg %p68
        $region54: #{tpu_custom_call.1} parent=47 // pred_check_branch
          %302 = sbr.rel (%p300) target = $region56
        $region55: #{tpu_custom_call.1} parent=47 // pred_region
          %303 = dma.done [#allocation6], 1024
        $region56: #{tpu_custom_call.1} parent=47 // pred_fallthru
          _
        // Predicated region
        $region57: #{tpu_custom_call.1} parent=47 // pred_check
          %p304 = pneg %p110
        $region58: #{tpu_custom_call.1} parent=47 // pred_check_branch
          %306 = sbr.rel (%p304) target = $region60
        $region59: #{tpu_custom_call.1} parent=47 // pred_region
          %307 = dma.done [#allocation6], 1024
        $region60: #{tpu_custom_call.1} parent=47 // pred_fallthru
          _
        // Predicated region
        $region61: #{tpu_custom_call.1} parent=47 // pred_check
          %p308 = pneg %p152
        $region62: #{tpu_custom_call.1} parent=47 // pred_check_branch
          %310 = sbr.rel (%p308) target = $region64
        $region63: #{tpu_custom_call.1} parent=47 // pred_region
          %311 = dma.done [#allocation9], 1024
        $region64: #{tpu_custom_call.1} parent=47 // pred_fallthru
          _
        %s312 = sand.u32 %s34, 1
        %s313 = scalar_lea.sflag [#allocation3], %s312
        %s314 = sand.u32 %s34, 1
        %s315 = smul.addr %s314, 4
        %s316 = scalar_lea.vmem [#allocation2], %s315
        %p317 = pneg %p47
        %p318 = pneg %p44
        %p319 = pneg %p68
        %p320 = pneg %p65
        %p321 = pneg %p89
        %p322 = pneg %p86
        %p323 = pneg %p110
        %p324 = pneg %p107
        %p325 = pneg %p131
        %p326 = pneg %p128
        %p327 = pneg %p152
        %p328 = pneg %p149
        %p329 = pneg %p173
        %p330 = pneg %p170
        %p331 = pneg %p199
        %p332 = pneg %p196
        %s333 = sand.u32 %s186, 1
        %s334 = scalar_lea.sflag [#allocation4], %s333
        %s335 = sand.u32 %s186, 1
        %s336 = smul.addr %s335, 8
        %s337 = scalar_lea.vmem [#allocation10], %s336
        %v339 = vld [vmem:[%s295] sm:$0xf]
        %v340 = vld [vmem:[#allocation5] sm:$0xf]
        %v341 = vld [vmem:[#allocation5 + $0x4] sm:$0xf]
        %v342 = vld [vmem:[#allocation5 + $0x8] sm:$0xf]
        %v343 = vld [vmem:[#allocation5 + $0xc] sm:$0xf]
        %v344 = vld [vmem:[#allocation5 + $0x10] sm:$0xf]
        %v345 = vld [vmem:[#allocation5 + $0x14] sm:$0xf]
        %v346 = vld [vmem:[#allocation5 + $0x18] sm:$0xf]
        %v347 = vld [vmem:[#allocation5 + $0x1c] sm:$0xf]
        %v348 = vld [vmem:[#allocation5 + $0x20] sm:$0xf]
        %v349 = vld [vmem:[#allocation5 + $0x24] sm:$0xf]
        %v350 = vld [vmem:[#allocation5 + $0x28] sm:$0xf]
        %v351 = vld [vmem:[#allocation5 + $0x2c] sm:$0xf]
        %v352 = vld [vmem:[#allocation5 + $0x30] sm:$0xf]
        %v353 = vld [vmem:[#allocation5 + $0x34] sm:$0xf]
        %v354 = vld [vmem:[#allocation5 + $0x38] sm:$0xf]
        %v355 = vld [vmem:[#allocation5 + $0x3c] sm:$0xf]
        %v356 = vld [vmem:[%s2] sm:$0x1]
        %v358 = vlaneseq
        %v359 = vshrl.u32 %v358, 7
        %v360 = vsub.s32 0, %v359
        %v361 = vrot.slane %v356, %v360
        %v379 = vunpack.c.l.b16 %v340
        %v380 = vunpack.c.l.b16 %v341
        %v381 = vunpack.c.l.b16 %v342
        %v382 = vunpack.c.l.b16 %v343
        %v383 = vunpack.c.l.b16 %v344
        %v384 = vunpack.c.l.b16 %v345
        %v385 = vunpack.c.l.b16 %v346
        %v386 = vunpack.c.l.b16 %v347
        %v387 = vunpack.c.l.b16 %v348
        %v388 = vunpack.c.l.b16 %v349
        %v389 = vunpack.c.l.b16 %v350
        %v390 = vunpack.c.l.b16 %v351
        %v391 = vunpack.c.l.b16 %v352
        %v392 = vunpack.c.l.b16 %v353
        %v393 = vunpack.c.l.b16 %v354
        %v394 = vunpack.c.l.b16 %v355
        %v395 = vpack.c.b16 %v380, %v379
        %v396 = vpack.c.b16 %v382, %v381
        %v397 = vpack.c.b16 %v384, %v383
        %v398 = vpack.c.b16 %v386, %v385
        %v399 = vpack.c.b16 %v388, %v387
        %v400 = vpack.c.b16 %v390, %v389
        %v401 = vpack.c.b16 %v392, %v391
        %v402 = vpack.c.b16 %v394, %v393
        %411 = vmatprep.subr.bf16.mxu0 0
        %412 = vmatpush1.bf16.msra.mxu0 %v395
        %413 = vmatprep.subr.bf16.mxu0 0
        %414 = vmatpush1.bf16.msra.mxu0 %v396
        %415 = vmatprep.subr.bf16.mxu0 0
        %416 = vmatpush1.bf16.msra.mxu0 %v397
        %417 = vmatprep.subr.bf16.mxu0 0
        %418 = vmatpush1.bf16.msra.mxu0 %v398
        %419 = vmatprep.subr.bf16.mxu0 0
        %420 = vmatpush1.bf16.msra.mxu0 %v399
        %421 = vmatprep.subr.bf16.mxu0 0
        %422 = vmatpush1.bf16.msra.mxu0 %v400
        %423 = vmatprep.subr.bf16.mxu0 0
        %424 = vmatpush1.bf16.msra.mxu0 %v401
        %425 = vmatprep.subr.bf16.mxu0 0
        %426 = vmatpush1.bf16.msra.mxu0 %v402
        %427 = vmatprep.subr.bf16.mxu0 0
        %428 = vmatpush1.bf16.msra.mxu0 0
        %429 = vmatprep.subr.bf16.mxu0 0
        %430 = vmatpush1.bf16.msra.mxu0 0
        %431 = vmatprep.subr.bf16.mxu0 0
        %432 = vmatpush1.bf16.msra.mxu0 0
        %433 = vmatprep.subr.bf16.mxu0 0
        %434 = vmatpush1.bf16.msra.mxu0 0
        %435 = vmatprep.subr.bf16.mxu0 0
        %436 = vmatpush1.bf16.msra.mxu0 0
        %437 = vmatprep.subr.bf16.mxu0 0
        %438 = vmatpush1.bf16.msra.mxu0 0
        %439 = vmatprep.subr.bf16.mxu0 0
        %440 = vmatpush1.bf16.msra.mxu0 0
        %441 = vmatprep.subr.bf16.mxu0 0
        %442 = vmatpush1.bf16.msra.mxu0 0
        %443 = vmatprep.mubr.bf16.mxu0 0
        %444 = vmatmul.mubr.bf16.gmra.mrb[0].mxu0 %v339
        %v445 = vpop.f32.mrb[0].mxu0
        %v446 = vadd.f32 %v361, %v445
        %v447 = vpop.f32.mrb[0].mxu0
        %v448 = vpop.f32.mrb[0].mxu0
        %v449 = vpop.f32.mrb[0].mxu0
        %450 = vdwg.mxu0
        %v451 = vmax.f32 %v446, 0.0
        %v452 = vpack.c.bf16 %v451, %v451
        %v453 = vld [vmem:[#allocation7] sm:$0xf]
        %v454 = vld [vmem:[#allocation7 + $0x4] sm:$0xf]
        %v455 = vld [vmem:[#allocation7 + $0x8] sm:$0xf]
        %v456 = vld [vmem:[#allocation7 + $0xc] sm:$0xf]
        %v457 = vld [vmem:[#allocation7 + $0x10] sm:$0xf]
        %v458 = vld [vmem:[#allocation7 + $0x14] sm:$0xf]
        %v459 = vld [vmem:[#allocation7 + $0x18] sm:$0xf]
        %v460 = vld [vmem:[#allocation7 + $0x1c] sm:$0xf]
        %v461 = vld [vmem:[#allocation7 + $0x20] sm:$0xf]
        %v462 = vld [vmem:[#allocation7 + $0x24] sm:$0xf]
        %v463 = vld [vmem:[#allocation7 + $0x28] sm:$0xf]
        %v464 = vld [vmem:[#allocation7 + $0x2c] sm:$0xf]
        %v465 = vld [vmem:[#allocation7 + $0x30] sm:$0xf]
        %v466 = vld [vmem:[#allocation7 + $0x34] sm:$0xf]
        %v467 = vld [vmem:[#allocation7 + $0x38] sm:$0xf]
        %v468 = vld [vmem:[#allocation7 + $0x3c] sm:$0xf]
        %v469 = vld [vmem:[%s4] sm:$0x1]
        %v471 = vlaneseq
        %v472 = vshrl.u32 %v471, 7
        %v473 = vsub.s32 0, %v472
        %v474 = vrot.slane %v469, %v473
        %v492 = vunpack.c.l.b16 %v453
        %v493 = vunpack.c.l.b16 %v454
        %v494 = vunpack.c.l.b16 %v455
        %v495 = vunpack.c.l.b16 %v456
        %v496 = vunpack.c.l.b16 %v457
        %v497 = vunpack.c.l.b16 %v458
        %v498 = vunpack.c.l.b16 %v459
        %v499 = vunpack.c.l.b16 %v460
        %v500 = vunpack.c.l.b16 %v461
        %v501 = vunpack.c.l.b16 %v462
        %v502 = vunpack.c.l.b16 %v463
        %v503 = vunpack.c.l.b16 %v464
        %v504 = vunpack.c.l.b16 %v465
        %v505 = vunpack.c.l.b16 %v466
        %v506 = vunpack.c.l.b16 %v467
        %v507 = vunpack.c.l.b16 %v468
        %v508 = vpack.c.b16 %v493, %v492
        %v509 = vpack.c.b16 %v495, %v494
        %v510 = vpack.c.b16 %v497, %v496
        %v511 = vpack.c.b16 %v499, %v498
        %v512 = vpack.c.b16 %v501, %v500
        %v513 = vpack.c.b16 %v503, %v502
        %v514 = vpack.c.b16 %v505, %v504
        %v515 = vpack.c.b16 %v507, %v506
        %524 = vmatprep.subr.bf16.mxu0 0
        %525 = vmatpush1.bf16.msra.mxu0 %v508
        %526 = vmatprep.subr.bf16.mxu0 0
        %527 = vmatpush1.bf16.msra.mxu0 %v509
        %528 = vmatprep.subr.bf16.mxu0 0
        %529 = vmatpush1.bf16.msra.mxu0 %v510
        %530 = vmatprep.subr.bf16.mxu0 0
        %531 = vmatpush1.bf16.msra.mxu0 %v511
        %532 = vmatprep.subr.bf16.mxu0 0
        %533 = vmatpush1.bf16.msra.mxu0 %v512
        %534 = vmatprep.subr.bf16.mxu0 0
        %535 = vmatpush1.bf16.msra.mxu0 %v513
        %536 = vmatprep.subr.bf16.mxu0 0
        %537 = vmatpush1.bf16.msra.mxu0 %v514
        %538 = vmatprep.subr.bf16.mxu0 0
        %539 = vmatpush1.bf16.msra.mxu0 %v515
        %540 = vmatprep.subr.bf16.mxu0 0
        %541 = vmatpush1.bf16.msra.mxu0 0
        %542 = vmatprep.subr.bf16.mxu0 0
        %543 = vmatpush1.bf16.msra.mxu0 0
        %544 = vmatprep.subr.bf16.mxu0 0
        %545 = vmatpush1.bf16.msra.mxu0 0
        %546 = vmatprep.subr.bf16.mxu0 0
        %547 = vmatpush1.bf16.msra.mxu0 0
        %548 = vmatprep.subr.bf16.mxu0 0
        %549 = vmatpush1.bf16.msra.mxu0 0
        %550 = vmatprep.subr.bf16.mxu0 0
        %551 = vmatpush1.bf16.msra.mxu0 0
        %552 = vmatprep.subr.bf16.mxu0 0
        %553 = vmatpush1.bf16.msra.mxu0 0
        %554 = vmatprep.subr.bf16.mxu0 0
        %555 = vmatpush1.bf16.msra.mxu0 0
        %556 = vmatprep.mubr.bf16.mxu0 0
        %557 = vmatmul.mubr.bf16.gmra.mrb[0].mxu0 %v452
        %v558 = vpop.f32.mrb[0].mxu0
        %v559 = vadd.f32 %v474, %v558
        %v560 = vpop.f32.mrb[0].mxu0
        %v561 = vpop.f32.mrb[0].mxu0
        %v562 = vpop.f32.mrb[0].mxu0
        %563 = vdwg.mxu0
        %v564 = vmax.f32 %v559, 0.0
        %v565 = vpack.c.bf16 %v564, %v564
        %v566 = vld [vmem:[#allocation8] sm:$0xf]
        %v567 = vld [vmem:[#allocation8 + $0x4] sm:$0xf]
        %v568 = vld [vmem:[#allocation8 + $0x8] sm:$0xf]
        %v569 = vld [vmem:[#allocation8 + $0xc] sm:$0xf]
        %v570 = vld [vmem:[#allocation8 + $0x10] sm:$0xf]
        %v571 = vld [vmem:[#allocation8 + $0x14] sm:$0xf]
        %v572 = vld [vmem:[#allocation8 + $0x18] sm:$0xf]
        %v573 = vld [vmem:[#allocation8 + $0x1c] sm:$0xf]
        %v574 = vld [vmem:[#allocation8 + $0x20] sm:$0xf]
        %v575 = vld [vmem:[#allocation8 + $0x24] sm:$0xf]
        %v576 = vld [vmem:[#allocation8 + $0x28] sm:$0xf]
        %v577 = vld [vmem:[#allocation8 + $0x2c] sm:$0xf]
        %v578 = vld [vmem:[#allocation8 + $0x30] sm:$0xf]
        %v579 = vld [vmem:[#allocation8 + $0x34] sm:$0xf]
        %v580 = vld [vmem:[#allocation8 + $0x38] sm:$0xf]
        %v581 = vld [vmem:[#allocation8 + $0x3c] sm:$0xf]
        %v582 = vld [vmem:[%s6] sm:$0x1]
        %v584 = vlaneseq
        %v585 = vshrl.u32 %v584, 7
        %v586 = vsub.s32 0, %v585
        %v587 = vrot.slane %v582, %v586
        %v605 = vunpack.c.l.b16 %v566
        %v606 = vunpack.c.l.b16 %v567
        %v607 = vunpack.c.l.b16 %v568
        %v608 = vunpack.c.l.b16 %v569
        %v609 = vunpack.c.l.b16 %v570
        %v610 = vunpack.c.l.b16 %v571
        %v611 = vunpack.c.l.b16 %v572
        %v612 = vunpack.c.l.b16 %v573
        %v613 = vunpack.c.l.b16 %v574
        %v614 = vunpack.c.l.b16 %v575
        %v615 = vunpack.c.l.b16 %v576
        %v616 = vunpack.c.l.b16 %v577
        %v617 = vunpack.c.l.b16 %v578
        %v618 = vunpack.c.l.b16 %v579
        %v619 = vunpack.c.l.b16 %v580
        %v620 = vunpack.c.l.b16 %v581
        %v621 = vpack.c.b16 %v606, %v605
        %v622 = vpack.c.b16 %v608, %v607
        %v623 = vpack.c.b16 %v610, %v609
        %v624 = vpack.c.b16 %v612, %v611
        %v625 = vpack.c.b16 %v614, %v613
        %v626 = vpack.c.b16 %v616, %v615
        %v627 = vpack.c.b16 %v618, %v617
        %v628 = vpack.c.b16 %v620, %v619
        %637 = vmatprep.subr.bf16.mxu0 0
        %638 = vmatpush1.bf16.msra.mxu0 %v621
        %639 = vmatprep.subr.bf16.mxu0 0
        %640 = vmatpush1.bf16.msra.mxu0 %v622
        %641 = vmatprep.subr.bf16.mxu0 0
        %642 = vmatpush1.bf16.msra.mxu0 %v623
        %643 = vmatprep.subr.bf16.mxu0 0
        %644 = vmatpush1.bf16.msra.mxu0 %v624
        %645 = vmatprep.subr.bf16.mxu0 0
        %646 = vmatpush1.bf16.msra.mxu0 %v625
        %647 = vmatprep.subr.bf16.mxu0 0
        %648 = vmatpush1.bf16.msra.mxu0 %v626
        %649 = vmatprep.subr.bf16.mxu0 0
        %650 = vmatpush1.bf16.msra.mxu0 %v627
        %651 = vmatprep.subr.bf16.mxu0 0
        %652 = vmatpush1.bf16.msra.mxu0 %v628
        %653 = vmatprep.subr.bf16.mxu0 0
        %654 = vmatpush1.bf16.msra.mxu0 0
        %655 = vmatprep.subr.bf16.mxu0 0
        %656 = vmatpush1.bf16.msra.mxu0 0
        %657 = vmatprep.subr.bf16.mxu0 0
        %658 = vmatpush1.bf16.msra.mxu0 0
        %659 = vmatprep.subr.bf16.mxu0 0
        %660 = vmatpush1.bf16.msra.mxu0 0
        %661 = vmatprep.subr.bf16.mxu0 0
        %662 = vmatpush1.bf16.msra.mxu0 0
        %663 = vmatprep.subr.bf16.mxu0 0
        %664 = vmatpush1.bf16.msra.mxu0 0
        %665 = vmatprep.subr.bf16.mxu0 0
        %666 = vmatpush1.bf16.msra.mxu0 0
        %667 = vmatprep.subr.bf16.mxu0 0
        %668 = vmatpush1.bf16.msra.mxu0 0
        %669 = vmatprep.mubr.bf16.mxu0 0
        %670 = vmatmul.mubr.bf16.gmra.mrb[0].mxu0 %v565
        %v671 = vpop.f32.mrb[0].mxu0
        %v672 = vadd.f32 %v587, %v671
        %v673 = vpop.f32.mrb[0].mxu0
        %v674 = vpop.f32.mrb[0].mxu0
        %v675 = vpop.f32.mrb[0].mxu0
        %676 = vdwg.mxu0
        %677 = vst [vmem:[%s337] sm:$0xff] %v672
        %s678 = sand.u32 %s186, 1
        %s679 = scalar_lea.sflag [#allocation4], %s678
        %s680 = sand.u32 %s186, 1
        %s681 = smul.addr %s680, 8
        %s682 = scalar_lea.vmem [#allocation10], %s681
        // Predicated region
        $region65: #{tpu_custom_call.1} parent=47 // pred_check
          %p683 = pneg %p196
        $region66: #{tpu_custom_call.1} parent=47 // pred_check_branch
          %685 = sbr.rel (%p683) target = $region68
        $region67: #{tpu_custom_call.1} parent=47 // pred_region
          %s687 = ssub.s32 128, 128
          %688 = vsyncadd %s679, %s687
          %s689 = smul.addr %s26, 128
          %s690 = scalar_lea.hbm %s7, %s689
          %s692 = sshll.u32 %s682, 4
          %s693 = int_to_ptr.vmem [resolvable:$true] %s692
          %695 = dma.vmem_to_hbm [thread:$0]  %s693, 128, %s690, %s679
        $region68: #{tpu_custom_call.1} parent=47 // pred_fallthru
          _
      $region48: #{tpu_custom_call.1} parent=5 // pred_fallthru
        _
      %p696 = scmp.le.s32.totalorder 2, %s21
      // Predicated region
      $region69: #{tpu_custom_call.1} parent=5 // pred_check
        %p697 = pneg %p696
      $region70: #{tpu_custom_call.1} parent=5 // pred_check_branch
        %699 = sbr.rel (%p697) target = $region72
      $region71: #{tpu_custom_call.1} parent=5 // pred_region
        %s700 = ssub.s32 %s21, 2
        // Predicated region
        $region73: #{tpu_custom_call.1} parent=71 // pred_check
          %p701 = pneg %p202
        $region74: #{tpu_custom_call.1} parent=71 // pred_check_branch
          %703 = sbr.rel (%p701) target = $region76
        $region75: #{tpu_custom_call.1} parent=71 // pred_region
          %s704 = sand.u32 %s187, 1
          %s705 = scalar_lea.sflag [#allocation4], %s704
          %s706 = sand.u32 %s187, 1
          %s707 = smul.addr %s706, 8
          %s708 = scalar_lea.vmem [#allocation10], %s707
          %709 = dma.done %s705, 128
        $region76: #{tpu_custom_call.1} parent=71 // pred_fallthru
          _
      $region72: #{tpu_custom_call.1} parent=5 // pred_fallthru
        _
    $region6: #{tpu_custom_call.1} parent=1 // loop_footer
      %s25 = sadd.s32 1, %s21
    $region7: #{tpu_custom_call.1} parent=1 // loop_footer_branch
      %20 = sbr.rel target = $region3
    $region8: #{tpu_custom_call.1} parent=1 // loop_exit
      _
    %710 = vsyncpa [#allocation3], 1
    %s711 = scalar_lea.sflag [#allocation3], 1
    %712 = vsyncpa %s711, 1
    %713 = vsyncpa [#allocation6], 1
    %714 = vsyncpa [#allocation9], 1
    %715 = vsyncpa [#allocation4], 1
    %s716 = scalar_lea.sflag [#allocation4], 1
    %717 = vsyncpa %s716, 1

</llo_original>
